<compile_context>
chip_gen: v5e
topology: v5e:2x2
jax: 0.10.0
libtpu: 0.0.40
codegen_flags: <defaults>
</compile_context>

<pallas_src>
import functools

import jax
import jax.numpy as jnp
from jax.experimental import pallas as pl
from jax.experimental.pallas import tpu as pltpu

BN_EPS = 1e-5
VMEM_LIMIT_BYTES = 32 * 1024 * 1024  # explicit (v5e default scoped limit is 16 MiB)


# ----------------------------------------------------------------------------
# Pallas kernels (all operate on lane-packed (H, W*C) tiles, one sample/tile)
# ----------------------------------------------------------------------------

def conv1_shortcut_kernel(x_ref, m_ref, y1_ref, ysc_ref, st_ref):
    """conv1 (3x3) + 1x1 projection shortcut, pre-BN, plus partial BN stats.

    x_ref : (1, H, W*Cin)        f32   packed input sample
    m_ref : (3, W*Cin, 2*W*Cout) bf16  banded weights [conv1 | shortcut@centre]
    y1_ref: (1, H, W*Cout)       f32   conv1 output (pre-BN)
    ysc_ref:(1, H, W*Cout)       f32   shortcut conv output (pre-BN)
    st_ref: (1, 4, W*Cout)       f32   [sum(y1), sum(y1^2), sum(sc), sum(sc^2)] over H
    """
    H = x_ref.shape[1]
    wc_in = x_ref.shape[2]
    wc_out = y1_ref.shape[2]

    xb = x_ref[0]                                           # (H, W*Cin) f32
    zero = jnp.zeros((1, wc_in), jnp.float32)
    xpad = jnp.concatenate([zero, xb, zero], axis=0)        # (H+2, W*Cin), H halo

    # 3 row-tap matmuls; accumulator initialized by the first matmul.
    acc = jnp.dot(xpad[0:H].astype(jnp.bfloat16), m_ref[0],
                  preferred_element_type=jnp.float32)
    acc = acc + jnp.dot(xpad[1:H + 1].astype(jnp.bfloat16), m_ref[1],
                        preferred_element_type=jnp.float32)
    acc = acc + jnp.dot(xpad[2:H + 2].astype(jnp.bfloat16), m_ref[2],
                        preferred_element_type=jnp.float32)

    y1 = acc[:, :wc_out]                                    # conv1 (pre-BN)
    ysc = acc[:, wc_out:]                                   # shortcut conv (pre-BN)
    y1_ref[0] = y1
    ysc_ref[0] = ysc
    st_ref[0] = jnp.concatenate(
        [jnp.sum(y1, axis=0, keepdims=True),
         jnp.sum(y1 * y1, axis=0, keepdims=True),
         jnp.sum(ysc, axis=0, keepdims=True),
         jnp.sum(ysc * ysc, axis=0, keepdims=True)], axis=0)


def conv2_kernel(y1_ref, s1_ref, b1_ref, m_ref, y2_ref, st_ref):
    """BN1 (folded scale/bias) + ReLU + conv2 (3x3), pre-BN2, plus partial stats.

    y1_ref: (1, H, W*Cout) f32   conv1 output (pre-BN)
    s1_ref, b1_ref: (1, W*Cout)  f32   BN1 folded as y*scale + bias (lane-packed)
    m_ref : (3, W*Cout, W*Cout)  bf16  banded conv2 weights
    y2_ref: (1, H, W*Cout)       f32   conv2 output (pre-BN)
    st_ref: (1, 2, W*Cout)       f32   [sum(y2), sum(y2^2)] over H
    """
    H = y1_ref.shape[1]
    wc = y1_ref.shape[2]

    a1 = jnp.maximum(y1_ref[0] * s1_ref[...] + b1_ref[...], 0.0)   # BN1 + ReLU
    zero = jnp.zeros((1, wc), jnp.float32)
    apad = jnp.concatenate([zero, a1, zero], axis=0)

    acc = jnp.dot(apad[0:H].astype(jnp.bfloat16), m_ref[0],
                  preferred_element_type=jnp.float32)
    acc = acc + jnp.dot(apad[1:H + 1].astype(jnp.bfloat16), m_ref[1],
                        preferred_element_type=jnp.float32)
    acc = acc + jnp.dot(apad[2:H + 2].astype(jnp.bfloat16), m_ref[2],
                        preferred_element_type=jnp.float32)

    y2_ref[0] = acc
    st_ref[0] = jnp.concatenate(
        [jnp.sum(acc, axis=0, keepdims=True),
         jnp.sum(acc * acc, axis=0, keepdims=True)], axis=0)


def residual_out_kernel(y2_ref, ysc_ref, s2_ref, b2_ref, ss_ref, bs_ref, out_ref):
    """BN2 + shortcut-BN (folded scale/bias) + residual add + ReLU."""
    y2 = y2_ref[0] * s2_ref[...] + b2_ref[...]
    sc = ysc_ref[0] * ss_ref[...] + bs_ref[...]
    out_ref[0] = jnp.maximum(y2 + sc, 0.0)


# ----------------------------------------------------------------------------
# Wrapper-side layout plumbing (built once, plain JAX)
# ----------------------------------------------------------------------------

def _banded_conv3x3(w, W):
    """PyTorch (Cout, Cin, 3, 3) conv weight -> (3, W*Cin, W*Cout) banded mats.

    M[di, wi*Cin+ci, wo*Cout+co] = w[co, ci, di, wi-wo+1]  if |wi-wo| <= 1 else 0
    so that  packed_out[h] = sum_di shifted_packed_in[h+di-1] @ M[di]
    implements a 3x3 'same' conv (the W zero-padding falls out of the band).
    """
    wt = jnp.transpose(w, (2, 3, 1, 0)).astype(jnp.float32)   # (di, dj, Cin, Cout)
    Cin, Cout = wt.shape[2], wt.shape[3]
    wi = jnp.arange(W)[:, None]
    wo = jnp.arange(W)[None, :]
    m = jnp.zeros((3, W, Cin, W, Cout), jnp.float32)
    for dj in range(3):
        mask = ((wi - wo) == (dj - 1)).astype(jnp.float32)     # (W, W)
        m = m + mask[None, :, None, :, None] * wt[:, dj][:, None, :, None, :]
    return m.reshape(3, W * Cin, W * Cout)


def _banded_conv1x1(w, W):
    """(Cout, Cin) 1x1 conv weight -> block-diagonal (W*Cin, W*Cout)."""
    Cout, Cin = w.shape
    eye = jnp.eye(W, dtype=jnp.float32)
    m = eye[:, None, :, None] * jnp.transpose(w).astype(jnp.float32)[None, :, None, :]
    return m.reshape(W * Cin, W * Cout)


def _pack_lanes(v, W):
    """Per-channel (Cout,) vector -> (1, W*Cout) lane-packed (channel minor)."""
    return jnp.tile(v.astype(jnp.float32), W).reshape(1, -1)


def _fold_bn(s, q, gamma, beta, count):
    """Sum / sum-of-squares -> affine (scale, bias) for train-mode BatchNorm."""
    mean = s / count
    var = q / count - mean * mean          # biased variance (PyTorch train mode)
    scale = gamma * jax.lax.rsqrt(var + BN_EPS)
    bias = beta - mean * scale
    return scale, bias


def _tpu_params():
    return pltpu.CompilerParams(
        dimension_semantics=("parallel",),      # megacore on v7x; no-op on v5e/v6e
        vmem_limit_bytes=VMEM_LIMIT_BYTES,
    )


# ----------------------------------------------------------------------------
# Forward pass
# ----------------------------------------------------------------------------

def basic_block_forward(x_nchw, params, stride=1):
    """BasicBlock forward.  x_nchw: (N, Cin, H, W) f32 -> (N, Cout, H, W) f32."""
    # TODO(synk): stride != 1 (strided conv / strided shortcut) not implemented.
    assert stride == 1

    N, Cin, H, W = x_nchw.shape
    Cout = params["w1"].shape[0]
    use_projection = (stride != 1) or (Cin != Cout)

    wc_in = W * Cin
    wc_out = W * Cout

    # --- layout plumbing: NCHW -> lane-packed (N, H, W*Cin) ------------------
    x_p = jnp.transpose(x_nchw, (0, 2, 3, 1)).reshape(N, H, wc_in)

    # Banded weight matrices (bf16 for the MXU).
    m1 = _banded_conv3x3(params["w1"], W)                     # (3, W*Cin, W*Cout)
    m2 = _banded_conv3x3(params["w2"], W).astype(jnp.bfloat16)
    if use_projection:
        ws = params["ws"][:, :, 0, 0]                         # (Cout, Cin)
    else:
        ws = jnp.eye(Cout, dtype=jnp.float32)                 # identity shortcut
    msc = _banded_conv1x1(ws, W)                              # (W*Cin, W*Cout)
    msc3 = jnp.zeros((3, wc_in, wc_out), jnp.float32).at[1].set(msc)
    ma = jnp.concatenate([m1, msc3], axis=-1).astype(jnp.bfloat16)  # (3, W*Cin, 2*W*Cout)

    # --- pass A: conv1 + shortcut conv + partial BN stats, tiled over N ------
    y1p, yscp, st_a = pl.pallas_call(
        conv1_shortcut_kernel,
        out_shape=(
            jax.ShapeDtypeStruct((N, H, wc_out), jnp.float32),
            jax.ShapeDtypeStruct((N, H, wc_out), jnp.float32),
            jax.ShapeDtypeStruct((N, 4, wc_out), jnp.float32),
        ),
        grid_spec=pltpu.PrefetchScalarGridSpec(
            num_scalar_prefetch=0,
            grid=(N,),
            in_specs=[
                pl.BlockSpec((1, H, wc_in), lambda n: (n, 0, 0)),
                pl.BlockSpec((3, wc_in, 2 * wc_out), lambda n: (0, 0, 0)),
            ],
            out_specs=[
                pl.BlockSpec((1, H, wc_out), lambda n: (n, 0, 0)),
                pl.BlockSpec((1, H, wc_out), lambda n: (n, 0, 0)),
                pl.BlockSpec((1, 4, wc_out), lambda n: (n, 0, 0)),
            ],
        ),
        compiler_params=_tpu_params(),
    )(x_p, ma)

    # Tiny cross-tile BN reductions + fold into scale/bias (plain JAX).
    count = jnp.float32(N * H * W)
    sa = st_a.reshape(N, 4, W, Cout).sum(axis=(0, 2))         # (4, Cout)
    s1, b1 = _fold_bn(sa[0], sa[1], params["g1"], params["b1"], count)
    if use_projection:
        ssc, bsc = _fold_bn(sa[2], sa[3], params["gs"], params["bs"], count)
    else:
        ssc = jnp.ones((Cout,), jnp.float32)                  # identity: out += x
        bsc = jnp.zeros((Cout,), jnp.float32)
    s1p, b1p = _pack_lanes(s1, W), _pack_lanes(b1, W)
    sscp, bscp = _pack_lanes(ssc, W), _pack_lanes(bsc, W)

    # --- pass B: BN1+ReLU+conv2 + partial BN2 stats, tiled over N ------------
    y2p, st_b = pl.pallas_call(
        conv2_kernel,
        out_shape=(
            jax.ShapeDtypeStruct((N, H, wc_out), jnp.float32),
            jax.ShapeDtypeStruct((N, 2, wc_out), jnp.float32),
        ),
        grid_spec=pltpu.PrefetchScalarGridSpec(
            num_scalar_prefetch=0,
            grid=(N,),
            in_specs=[
                pl.BlockSpec((1, H, wc_out), lambda n: (n, 0, 0)),
                pl.BlockSpec((1, wc_out), lambda n: (0, 0)),
                pl.BlockSpec((1, wc_out), lambda n: (0, 0)),
                pl.BlockSpec((3, wc_out, wc_out), lambda n: (0, 0, 0)),
            ],
            out_specs=[
                pl.BlockSpec((1, H, wc_out), lambda n: (n, 0, 0)),
                pl.BlockSpec((1, 2, wc_out), lambda n: (n, 0, 0)),
            ],
        ),
        compiler_params=_tpu_params(),
    )(y1p, s1p, b1p, m2)

    sb = st_b.reshape(N, 2, W, Cout).sum(axis=(0, 2))         # (2, Cout)
    s2, b2 = _fold_bn(sb[0], sb[1], params["g2"], params["b2"], count)
    s2p, b2p = _pack_lanes(s2, W), _pack_lanes(b2, W)

    # --- pass C: BN2 + shortcut-BN + residual add + ReLU, tiled over N -------
    out_p = pl.pallas_call(
        residual_out_kernel,
        out_shape=jax.ShapeDtypeStruct((N, H, wc_out), jnp.float32),
        grid_spec=pltpu.PrefetchScalarGridSpec(
            num_scalar_prefetch=0,
            grid=(N,),
            in_specs=[
                pl.BlockSpec((1, H, wc_out), lambda n: (n, 0, 0)),
                pl.BlockSpec((1, H, wc_out), lambda n: (n, 0, 0)),
                pl.BlockSpec((1, wc_out), lambda n: (0, 0)),
                pl.BlockSpec((1, wc_out), lambda n: (0, 0)),
                pl.BlockSpec((1, wc_out), lambda n: (0, 0)),
                pl.BlockSpec((1, wc_out), lambda n: (0, 0)),
            ],
            out_specs=pl.BlockSpec((1, H, wc_out), lambda n: (n, 0, 0)),
        ),
        compiler_params=_tpu_params(),
    )(y2p, yscp, s2p, b2p, sscp, bscp)

    # packed (N, H, W*Cout) -> NCHW
    return jnp.transpose(out_p.reshape(N, H, W, Cout), (0, 3, 1, 2))


# ----------------------------------------------------------------------------
# Reference (plain JAX/XLA) for a runtime self-check
# ----------------------------------------------------------------------------

def basic_block_reference(x, params, stride=1):
    def conv(x, w, s, pad):
        return jax.lax.conv_general_dilated(
            x, w, window_strides=(s, s), padding=pad,
            dimension_numbers=("NCHW", "OIHW", "NCHW"))

    def bn(y, g, b):
        mean = jnp.mean(y, axis=(0, 2, 3), keepdims=True)
        var = jnp.mean((y - mean) ** 2, axis=(0, 2, 3), keepdims=True)
        return ((y - mean) * jax.lax.rsqrt(var + BN_EPS) * g.reshape(1, -1, 1, 1)
                + b.reshape(1, -1, 1, 1))

    N, Cin, H, W = x.shape
    Cout = params["w1"].shape[0]
    out = jax.nn.relu(bn(conv(x, params["w1"], stride, ((1, 1), (1, 1))),
                         params["g1"], params["b1"]))
    out = bn(conv(out, params["w2"], 1, ((1, 1), (1, 1))),
             params["g2"], params["b2"])
    if stride != 1 or Cin != Cout:
        sc = bn(conv(x, params["ws"], stride, "VALID"), params["gs"], params["bs"])
    else:
        sc = x
    return jax.nn.relu(out + sc)


def init_params(key, in_channels, out_channels):
    """Deterministic synthetic parameters (PyTorch weight layouts)."""
    ks = jax.random.split(key, 9)
    return {
        "w1": 0.1 * jax.random.normal(ks[0], (out_channels, in_channels, 3, 3), jnp.float32),
        "g1": 1.0 + 0.1 * jax.random.normal(ks[1], (out_channels,), jnp.float32),
        "b1": 0.1 * jax.random.normal(ks[2], (out_channels,), jnp.float32),
        "w2": 0.1 * jax.random.normal(ks[3], (out_channels, out_channels, 3, 3), jnp.float32),
        "g2": 1.0 + 0.1 * jax.random.normal(ks[4], (out_channels,), jnp.float32),
        "b2": 0.1 * jax.random.normal(ks[5], (out_channels,), jnp.float32),
        "ws": 0.1 * jax.random.normal(ks[6], (out_channels, in_channels, 1, 1), jnp.float32),
        "gs": 1.0 + 0.1 * jax.random.normal(ks[7], (out_channels,), jnp.float32),
        "bs": 0.1 * jax.random.normal(ks[8], (out_channels,), jnp.float32),
    }


if __name__ == "__main__":
    key = jax.random.PRNGKey(0)
    k_x, k_p = jax.random.split(key)

    # Cin != Cout -> projection shortcut path (stride=1).  W*Cout = 128 lanes.
    N, Cin, H, W = 2, 4, 16, 16
    Cout = 8

    x = jax.random.normal(k_x, (N, Cin, H, W), jnp.float32)
    params = init_params(k_p, Cin, Cout)

    fwd = jax.jit(functools.partial(basic_block_forward, stride=1))
    out = jax.block_until_ready(fwd(x, params))

    assert out.shape == (N, Cout, H, W)
    assert bool(jnp.all(jnp.isfinite(out)))
    assert bool(jnp.all(out >= 0.0))  # final ReLU

    # Self-check against plain-XLA reference (bf16 matmuls -> loose tolerance).
    ref = basic_block_reference(x, params, stride=1)
    max_err = float(jnp.max(jnp.abs(out - ref)))
    assert max_err < 0.1, f"max abs error vs reference: {max_err}"

    print("KERNEL_OK")
</pallas_src>

<mosaic_0001>
module attributes {stable_mosaic.version = 11 : i64} {
  func.func @conv1_shortcut_kernel(%arg0: i32, %arg1: memref<1x16x64xf32, #tpu.memory_space<vmem>>, %arg2: memref<3x64x256xbf16, #tpu.memory_space<vmem>>, %arg3: memref<1x16x128xf32, #tpu.memory_space<vmem>>, %arg4: memref<1x16x128xf32, #tpu.memory_space<vmem>>, %arg5: memref<1x4x128xf32, #tpu.memory_space<vmem>>) attributes {dimension_semantics = [#tpu.dimension_semantics<parallel>], iteration_bounds = array<i64: 2>, scalar_prefetch = 0 : i64, scratch_operands = 0 : i64, tpu.core_type = #tpu.core_type<tc>, window_params = [{transform_indices = @transform_0, window_bounds = array<i64: 1, 16, 64>}, {pipeline_mode = #tpu.pipeline_mode<synchronous>, transform_indices = @transform_1, window_bounds = array<i64: 3, 64, 256>}, {transform_indices = @transform_2, window_bounds = array<i64: 1, 16, 128>}, {transform_indices = @transform_3, window_bounds = array<i64: 1, 16, 128>}, {transform_indices = @transform_4, window_bounds = array<i64: 1, 4, 128>}]} {
    %c0 = arith.constant 0 : index
    %c0_0 = arith.constant 0 : index
    %c0_1 = arith.constant 0 : index
    %0 = vector.load %arg1[%c0, %c0_0, %c0_1] : memref<1x16x64xf32, #tpu.memory_space<vmem>>, vector<1x16x64xf32>
    %1 = vector.shape_cast %0 : vector<1x16x64xf32> to vector<16x64xf32>
    %cst = arith.constant 0.000000e+00 : f32
    %2 = vector.broadcast %cst : f32 to vector<1x64xf32>
    %3 = tpu.concatenate %2, %1, %2 in 0 : vector<1x64xf32>, vector<16x64xf32>, vector<1x64xf32> -> vector<18x64xf32>
    %4 = vector.extract_strided_slice %3 {offsets = [0, 0], sizes = [16, 64], strides = [1, 1]} : vector<18x64xf32> to vector<16x64xf32>
    %5 = arith.truncf %4 : vector<16x64xf32> to vector<16x64xbf16>
    %c0_2 = arith.constant 0 : index
    %c0_3 = arith.constant 0 : index
    %c0_4 = arith.constant 0 : index
    %6 = vector.load %arg2[%c0_2, %c0_3, %c0_4] : memref<3x64x256xbf16, #tpu.memory_space<vmem>>, vector<1x64x256xbf16>
    %7 = vector.shape_cast %6 : vector<1x64x256xbf16> to vector<64x256xbf16>
    %cst_5 = arith.constant dense<0.000000e+00> : vector<16x256xf32>
    %8 = tpu.matmul %5, %7, %cst_5 {dimension_numbers = #tpu.dot_dimension_numbers<[1], [0], [0], [1], [0, 0, 1, 1], [], []>} : vector<16x64xbf16>, vector<64x256xbf16>, vector<16x256xf32> -> vector<16x256xf32>
    %9 = vector.extract_strided_slice %3 {offsets = [1, 0], sizes = [16, 64], strides = [1, 1]} : vector<18x64xf32> to vector<16x64xf32>
    %10 = arith.truncf %9 : vector<16x64xf32> to vector<16x64xbf16>
    %c1 = arith.constant 1 : index
    %c0_6 = arith.constant 0 : index
    %c0_7 = arith.constant 0 : index
    %11 = vector.load %arg2[%c1, %c0_6, %c0_7] : memref<3x64x256xbf16, #tpu.memory_space<vmem>>, vector<1x64x256xbf16>
    %12 = vector.shape_cast %11 : vector<1x64x256xbf16> to vector<64x256xbf16>
    %cst_8 = arith.constant dense<0.000000e+00> : vector<16x256xf32>
    %13 = tpu.matmul %10, %12, %cst_8 {dimension_numbers = #tpu.dot_dimension_numbers<[1], [0], [0], [1], [0, 0, 1, 1], [], []>} : vector<16x64xbf16>, vector<64x256xbf16>, vector<16x256xf32> -> vector<16x256xf32>
    %14 = arith.addf %8, %13 : vector<16x256xf32>
    %15 = vector.extract_strided_slice %3 {offsets = [2, 0], sizes = [16, 64], strides = [1, 1]} : vector<18x64xf32> to vector<16x64xf32>
    %16 = arith.truncf %15 : vector<16x64xf32> to vector<16x64xbf16>
    %c2 = arith.constant 2 : index
    %c0_9 = arith.constant 0 : index
    %c0_10 = arith.constant 0 : index
    %17 = vector.load %arg2[%c2, %c0_9, %c0_10] : memref<3x64x256xbf16, #tpu.memory_space<vmem>>, vector<1x64x256xbf16>
    %18 = vector.shape_cast %17 : vector<1x64x256xbf16> to vector<64x256xbf16>
    %cst_11 = arith.constant dense<0.000000e+00> : vector<16x256xf32>
    %19 = tpu.matmul %16, %18, %cst_11 {dimension_numbers = #tpu.dot_dimension_numbers<[1], [0], [0], [1], [0, 0, 1, 1], [], []>} : vector<16x64xbf16>, vector<64x256xbf16>, vector<16x256xf32> -> vector<16x256xf32>
    %20 = arith.addf %14, %19 : vector<16x256xf32>
    %21 = vector.extract_strided_slice %20 {offsets = [0, 0], sizes = [16, 128], strides = [1, 1]} : vector<16x256xf32> to vector<16x128xf32>
    %22 = vector.extract_strided_slice %20 {offsets = [0, 128], sizes = [16, 128], strides = [1, 1]} : vector<16x256xf32> to vector<16x128xf32>
    %c0_12 = arith.constant 0 : index
    %c0_13 = arith.constant 0 : index
    %c0_14 = arith.constant 0 : index
    %23 = vector.load %arg3[%c0_12, %c0_13, %c0_14] : memref<1x16x128xf32, #tpu.memory_space<vmem>>, vector<1x16x128xf32>
    %24 = vector.shape_cast %23 : vector<1x16x128xf32> to vector<16x128xf32>
    %25 = vector.shape_cast %21 : vector<16x128xf32> to vector<1x16x128xf32>
    tpu.vector_store %arg3[%c0_12, %c0_13, %c0_14], %25 {strides = array<i32>} : memref<1x16x128xf32, #tpu.memory_space<vmem>>, vector<1x16x128xf32>,
    %c0_15 = arith.constant 0 : index
    %c0_16 = arith.constant 0 : index
    %c0_17 = arith.constant 0 : index
    %26 = vector.load %arg4[%c0_15, %c0_16, %c0_17] : memref<1x16x128xf32, #tpu.memory_space<vmem>>, vector<1x16x128xf32>
    %27 = vector.shape_cast %26 : vector<1x16x128xf32> to vector<16x128xf32>
    %28 = vector.shape_cast %22 : vector<16x128xf32> to vector<1x16x128xf32>
    tpu.vector_store %arg4[%c0_15, %c0_16, %c0_17], %28 {strides = array<i32>} : memref<1x16x128xf32, #tpu.memory_space<vmem>>, vector<1x16x128xf32>,
    %cst_18 = arith.constant dense<0.000000e+00> : vector<128xf32>
    %29 = vector.multi_reduction <add>, %21, %cst_18 [0] : vector<16x128xf32> to vector<128xf32>
    %30 = vector.shape_cast %29 : vector<128xf32> to vector<1x128xf32>
    %31 = arith.mulf %21, %21 : vector<16x128xf32>
    %cst_19 = arith.constant dense<0.000000e+00> : vector<128xf32>
    %32 = vector.multi_reduction <add>, %31, %cst_19 [0] : vector<16x128xf32> to vector<128xf32>
    %33 = vector.shape_cast %32 : vector<128xf32> to vector<1x128xf32>
    %cst_20 = arith.constant dense<0.000000e+00> : vector<128xf32>
    %34 = vector.multi_reduction <add>, %22, %cst_20 [0] : vector<16x128xf32> to vector<128xf32>
    %35 = vector.shape_cast %34 : vector<128xf32> to vector<1x128xf32>
    %36 = arith.mulf %22, %22 : vector<16x128xf32>
    %cst_21 = arith.constant dense<0.000000e+00> : vector<128xf32>
    %37 = vector.multi_reduction <add>, %36, %cst_21 [0] : vector<16x128xf32> to vector<128xf32>
    %38 = vector.shape_cast %37 : vector<128xf32> to vector<1x128xf32>
    %39 = tpu.concatenate %30, %33, %35, %38 in 0 : vector<1x128xf32>, vector<1x128xf32>, vector<1x128xf32>, vector<1x128xf32> -> vector<4x128xf32>
    %c0_22 = arith.constant 0 : index
    %c0_23 = arith.constant 0 : index
    %c0_24 = arith.constant 0 : index
    %40 = vector.load %arg5[%c0_22, %c0_23, %c0_24] : memref<1x4x128xf32, #tpu.memory_space<vmem>>, vector<1x4x128xf32>
    %41 = vector.shape_cast %40 : vector<1x4x128xf32> to vector<4x128xf32>
    %42 = vector.shape_cast %39 : vector<4x128xf32> to vector<1x4x128xf32>
    tpu.vector_store %arg5[%c0_22, %c0_23, %c0_24], %42 {strides = array<i32>} : memref<1x4x128xf32, #tpu.memory_space<vmem>>, vector<1x4x128xf32>,
    return
  }
  func.func @transform_0(%arg0: i32) -> (i32, i32, i32) {
    %c0_i32 = arith.constant 0 : i32
    %c0_i32_0 = arith.constant 0 : i32
    %c0_i32_1 = arith.constant 0 : i32
    return %arg0, %c0_i32, %c0_i32_0 : i32, i32, i32
  }
  func.func @transform_1(%arg0: i32) -> (i32, i32, i32) {
    %c0_i32 = arith.constant 0 : i32
    %c0_i32_0 = arith.constant 0 : i32
    %c0_i32_1 = arith.constant 0 : i32
    %c0_i32_2 = arith.constant 0 : i32
    return %c0_i32, %c0_i32_0, %c0_i32_1 : i32, i32, i32
  }
  func.func @transform_2(%arg0: i32) -> (i32, i32, i32) {
    %c0_i32 = arith.constant 0 : i32
    %c0_i32_0 = arith.constant 0 : i32
    %c0_i32_1 = arith.constant 0 : i32
    return %arg0, %c0_i32, %c0_i32_0 : i32, i32, i32
  }
  func.func @transform_3(%arg0: i32) -> (i32, i32, i32) {
    %c0_i32 = arith.constant 0 : i32
    %c0_i32_0 = arith.constant 0 : i32
    %c0_i32_1 = arith.constant 0 : i32
    return %arg0, %c0_i32, %c0_i32_0 : i32, i32, i32
  }
  func.func @transform_4(%arg0: i32) -> (i32, i32, i32) {
    %c0_i32 = arith.constant 0 : i32
    %c0_i32_0 = arith.constant 0 : i32
    %c0_i32_1 = arith.constant 0 : i32
    return %arg0, %c0_i32, %c0_i32_0 : i32, i32, i32
  }
}

module attributes {stable_mosaic.version = 11 : i64} {
  func.func @conv2_kernel(%arg0: i32, %arg1: memref<1x16x128xf32, #tpu.memory_space<vmem>>, %arg2: memref<1x128xf32, #tpu.memory_space<vmem>>, %arg3: memref<1x128xf32, #tpu.memory_space<vmem>>, %arg4: memref<3x128x128xbf16, #tpu.memory_space<vmem>>, %arg5: memref<1x16x128xf32, #tpu.memory_space<vmem>>, %arg6: memref<1x2x128xf32, #tpu.memory_space<vmem>>) attributes {dimension_semantics = [#tpu.dimension_semantics<parallel>], iteration_bounds = array<i64: 2>, scalar_prefetch = 0 : i64, scratch_operands = 0 : i64, tpu.core_type = #tpu.core_type<tc>, window_params = [{transform_indices = @transform_0, window_bounds = array<i64: 1, 16, 128>}, {pipeline_mode = #tpu.pipeline_mode<synchronous>, transform_indices = @transform_1, window_bounds = array<i64: 1, 128>}, {pipeline_mode = #tpu.pipeline_mode<synchronous>, transform_indices = @transform_2, window_bounds = array<i64: 1, 128>}, {pipeline_mode = #tpu.pipeline_mode<synchronous>, transform_indices = @transform_3, window_bounds = array<i64: 3, 128, 128>}, {transform_indices = @transform_4, window_bounds = array<i64: 1, 16, 128>}, {transform_indices = @transform_5, window_bounds = array<i64: 1, 2, 128>}]} {
    %c0 = arith.constant 0 : index
    %c0_0 = arith.constant 0 : index
    %c0_1 = arith.constant 0 : index
    %0 = vector.load %arg1[%c0, %c0_0, %c0_1] : memref<1x16x128xf32, #tpu.memory_space<vmem>>, vector<1x16x128xf32>
    %1 = vector.shape_cast %0 : vector<1x16x128xf32> to vector<16x128xf32>
    %c0_2 = arith.constant 0 : index
    %c0_3 = arith.constant 0 : index
    %2 = vector.load %arg2[%c0_2, %c0_3] : memref<1x128xf32, #tpu.memory_space<vmem>>, vector<1x128xf32>
    %3 = vector.broadcast %2 : vector<1x128xf32> to vector<16x128xf32>
    %4 = arith.mulf %1, %3 : vector<16x128xf32>
    %c0_4 = arith.constant 0 : index
    %c0_5 = arith.constant 0 : index
    %5 = vector.load %arg3[%c0_4, %c0_5] : memref<1x128xf32, #tpu.memory_space<vmem>>, vector<1x128xf32>
    %6 = vector.broadcast %5 : vector<1x128xf32> to vector<16x128xf32>
    %7 = arith.addf %4, %6 : vector<16x128xf32>
    %cst = arith.constant 0.000000e+00 : f32
    %8 = vector.broadcast %cst : f32 to vector<16x128xf32>
    %9 = arith.maximumf %7, %8 : vector<16x128xf32>
    %cst_6 = arith.constant 0.000000e+00 : f32
    %10 = vector.broadcast %cst_6 : f32 to vector<1x128xf32>
    %11 = tpu.concatenate %10, %9, %10 in 0 : vector<1x128xf32>, vector<16x128xf32>, vector<1x128xf32> -> vector<18x128xf32>
    %12 = vector.extract_strided_slice %11 {offsets = [0, 0], sizes = [16, 128], strides = [1, 1]} : vector<18x128xf32> to vector<16x128xf32>
    %13 = arith.truncf %12 : vector<16x128xf32> to vector<16x128xbf16>
    %c0_7 = arith.constant 0 : index
    %c0_8 = arith.constant 0 : index
    %c0_9 = arith.constant 0 : index
    %14 = vector.load %arg4[%c0_7, %c0_8, %c0_9] : memref<3x128x128xbf16, #tpu.memory_space<vmem>>, vector<1x128x128xbf16>
    %15 = vector.shape_cast %14 : vector<1x128x128xbf16> to vector<128x128xbf16>
    %cst_10 = arith.constant dense<0.000000e+00> : vector<16x128xf32>
    %16 = tpu.matmul %13, %15, %cst_10 {dimension_numbers = #tpu.dot_dimension_numbers<[1], [0], [0], [1], [0, 0, 1, 1], [], []>} : vector<16x128xbf16>, vector<128x128xbf16>, vector<16x128xf32> -> vector<16x128xf32>
    %17 = vector.extract_strided_slice %11 {offsets = [1, 0], sizes = [16, 128], strides = [1, 1]} : vector<18x128xf32> to vector<16x128xf32>
    %18 = arith.truncf %17 : vector<16x128xf32> to vector<16x128xbf16>
    %c1 = arith.constant 1 : index
    %c0_11 = arith.constant 0 : index
    %c0_12 = arith.constant 0 : index
    %19 = vector.load %arg4[%c1, %c0_11, %c0_12] : memref<3x128x128xbf16, #tpu.memory_space<vmem>>, vector<1x128x128xbf16>
    %20 = vector.shape_cast %19 : vector<1x128x128xbf16> to vector<128x128xbf16>
    %cst_13 = arith.constant dense<0.000000e+00> : vector<16x128xf32>
    %21 = tpu.matmul %18, %20, %cst_13 {dimension_numbers = #tpu.dot_dimension_numbers<[1], [0], [0], [1], [0, 0, 1, 1], [], []>} : vector<16x128xbf16>, vector<128x128xbf16>, vector<16x128xf32> -> vector<16x128xf32>
    %22 = arith.addf %16, %21 : vector<16x128xf32>
    %23 = vector.extract_strided_slice %11 {offsets = [2, 0], sizes = [16, 128], strides = [1, 1]} : vector<18x128xf32> to vector<16x128xf32>
    %24 = arith.truncf %23 : vector<16x128xf32> to vector<16x128xbf16>
    %c2 = arith.constant 2 : index
    %c0_14 = arith.constant 0 : index
    %c0_15 = arith.constant 0 : index
    %25 = vector.load %arg4[%c2, %c0_14, %c0_15] : memref<3x128x128xbf16, #tpu.memory_space<vmem>>, vector<1x128x128xbf16>
    %26 = vector.shape_cast %25 : vector<1x128x128xbf16> to vector<128x128xbf16>
    %cst_16 = arith.constant dense<0.000000e+00> : vector<16x128xf32>
    %27 = tpu.matmul %24, %26, %cst_16 {dimension_numbers = #tpu.dot_dimension_numbers<[1], [0], [0], [1], [0, 0, 1, 1], [], []>} : vector<16x128xbf16>, vector<128x128xbf16>, vector<16x128xf32> -> vector<16x128xf32>
    %28 = arith.addf %22, %27 : vector<16x128xf32>
    %c0_17 = arith.constant 0 : index
    %c0_18 = arith.constant 0 : index
    %c0_19 = arith.constant 0 : index
    %29 = vector.load %arg5[%c0_17, %c0_18, %c0_19] : memref<1x16x128xf32, #tpu.memory_space<vmem>>, vector<1x16x128xf32>
    %30 = vector.shape_cast %29 : vector<1x16x128xf32> to vector<16x128xf32>
    %31 = vector.shape_cast %28 : vector<16x128xf32> to vector<1x16x128xf32>
    tpu.vector_store %arg5[%c0_17, %c0_18, %c0_19], %31 {strides = array<i32>} : memref<1x16x128xf32, #tpu.memory_space<vmem>>, vector<1x16x128xf32>,
    %cst_20 = arith.constant dense<0.000000e+00> : vector<128xf32>
    %32 = vector.multi_reduction <add>, %28, %cst_20 [0] : vector<16x128xf32> to vector<128xf32>
    %33 = vector.shape_cast %32 : vector<128xf32> to vector<1x128xf32>
    %34 = arith.mulf %28, %28 : vector<16x128xf32>
    %cst_21 = arith.constant dense<0.000000e+00> : vector<128xf32>
    %35 = vector.multi_reduction <add>, %34, %cst_21 [0] : vector<16x128xf32> to vector<128xf32>
    %36 = vector.shape_cast %35 : vector<128xf32> to vector<1x128xf32>
    %37 = tpu.concatenate %33, %36 in 0 : vector<1x128xf32>, vector<1x128xf32> -> vector<2x128xf32>
    %c0_22 = arith.constant 0 : index
    %c0_23 = arith.constant 0 : index
    %c0_24 = arith.constant 0 : index
    %38 = vector.load %arg6[%c0_22, %c0_23, %c0_24] : memref<1x2x128xf32, #tpu.memory_space<vmem>>, vector<1x2x128xf32>
    %39 = vector.shape_cast %38 : vector<1x2x128xf32> to vector<2x128xf32>
    %40 = vector.shape_cast %37 : vector<2x128xf32> to vector<1x2x128xf32>
    tpu.vector_store %arg6[%c0_22, %c0_23, %c0_24], %40 {strides = array<i32>} : memref<1x2x128xf32, #tpu.memory_space<vmem>>, vector<1x2x128xf32>,
    return
  }
  func.func @transform_0(%arg0: i32) -> (i32, i32, i32) {
    %c0_i32 = arith.constant 0 : i32
    %c0_i32_0 = arith.constant 0 : i32
    %c0_i32_1 = arith.constant 0 : i32
    return %arg0, %c0_i32, %c0_i32_0 : i32, i32, i32
  }
  func.func @transform_1(%arg0: i32) -> (i32, i32) {
    %c0_i32 = arith.constant 0 : i32
    %c0_i32_0 = arith.constant 0 : i32
    %c0_i32_1 = arith.constant 0 : i32
    return %c0_i32, %c0_i32_0 : i32, i32
  }
  func.func @transform_2(%arg0: i32) -> (i32, i32) {
    %c0_i32 = arith.constant 0 : i32
    %c0_i32_0 = arith.constant 0 : i32
    %c0_i32_1 = arith.constant 0 : i32
    return %c0_i32, %c0_i32_0 : i32, i32
  }
  func.func @transform_3(%arg0: i32) -> (i32, i32, i32) {
    %c0_i32 = arith.constant 0 : i32
    %c0_i32_0 = arith.constant 0 : i32
    %c0_i32_1 = arith.constant 0 : i32
    %c0_i32_2 = arith.constant 0 : i32
    return %c0_i32, %c0_i32_0, %c0_i32_1 : i32, i32, i32
  }
  func.func @transform_4(%arg0: i32) -> (i32, i32, i32) {
    %c0_i32 = arith.constant 0 : i32
    %c0_i32_0 = arith.constant 0 : i32
    %c0_i32_1 = arith.constant 0 : i32
    return %arg0, %c0_i32, %c0_i32_0 : i32, i32, i32
  }
  func.func @transform_5(%arg0: i32) -> (i32, i32, i32) {
    %c0_i32 = arith.constant 0 : i32
    %c0_i32_0 = arith.constant 0 : i32
    %c0_i32_1 = arith.constant 0 : i32
    return %arg0, %c0_i32, %c0_i32_0 : i32, i32, i32
  }
}

module attributes {stable_mosaic.version = 11 : i64} {
  func.func @residual_out_kernel(%arg0: i32, %arg1: memref<1x16x128xf32, #tpu.memory_space<vmem>>, %arg2: memref<1x16x128xf32, #tpu.memory_space<vmem>>, %arg3: memref<1x128xf32, #tpu.memory_space<vmem>>, %arg4: memref<1x128xf32, #tpu.memory_space<vmem>>, %arg5: memref<1x128xf32, #tpu.memory_space<vmem>>, %arg6: memref<1x128xf32, #tpu.memory_space<vmem>>, %arg7: memref<1x16x128xf32, #tpu.memory_space<vmem>>) attributes {dimension_semantics = [#tpu.dimension_semantics<parallel>], iteration_bounds = array<i64: 2>, scalar_prefetch = 0 : i64, scratch_operands = 0 : i64, tpu.core_type = #tpu.core_type<tc>, window_params = [{transform_indices = @transform_0, window_bounds = array<i64: 1, 16, 128>}, {transform_indices = @transform_1, window_bounds = array<i64: 1, 16, 128>}, {pipeline_mode = #tpu.pipeline_mode<synchronous>, transform_indices = @transform_2, window_bounds = array<i64: 1, 128>}, {pipeline_mode = #tpu.pipeline_mode<synchronous>, transform_indices = @transform_3, window_bounds = array<i64: 1, 128>}, {pipeline_mode = #tpu.pipeline_mode<synchronous>, transform_indices = @transform_4, window_bounds = array<i64: 1, 128>}, {pipeline_mode = #tpu.pipeline_mode<synchronous>, transform_indices = @transform_5, window_bounds = array<i64: 1, 128>}, {transform_indices = @transform_6, window_bounds = array<i64: 1, 16, 128>}]} {
    %c0 = arith.constant 0 : index
    %c0_0 = arith.constant 0 : index
    %c0_1 = arith.constant 0 : index
    %0 = vector.load %arg1[%c0, %c0_0, %c0_1] : memref<1x16x128xf32, #tpu.memory_space<vmem>>, vector<1x16x128xf32>
    %1 = vector.shape_cast %0 : vector<1x16x128xf32> to vector<16x128xf32>
    %c0_2 = arith.constant 0 : index
    %c0_3 = arith.constant 0 : index
    %2 = vector.load %arg3[%c0_2, %c0_3] : memref<1x128xf32, #tpu.memory_space<vmem>>, vector<1x128xf32>
    %3 = vector.broadcast %2 : vector<1x128xf32> to vector<16x128xf32>
    %4 = arith.mulf %1, %3 : vector<16x128xf32>
    %c0_4 = arith.constant 0 : index
    %c0_5 = arith.constant 0 : index
    %5 = vector.load %arg4[%c0_4, %c0_5] : memref<1x128xf32, #tpu.memory_space<vmem>>, vector<1x128xf32>
    %6 = vector.broadcast %5 : vector<1x128xf32> to vector<16x128xf32>
    %7 = arith.addf %4, %6 : vector<16x128xf32>
    %c0_6 = arith.constant 0 : index
    %c0_7 = arith.constant 0 : index
    %c0_8 = arith.constant 0 : index
    %8 = vector.load %arg2[%c0_6, %c0_7, %c0_8] : memref<1x16x128xf32, #tpu.memory_space<vmem>>, vector<1x16x128xf32>
    %9 = vector.shape_cast %8 : vector<1x16x128xf32> to vector<16x128xf32>
    %c0_9 = arith.constant 0 : index
    %c0_10 = arith.constant 0 : index
    %10 = vector.load %arg5[%c0_9, %c0_10] : memref<1x128xf32, #tpu.memory_space<vmem>>, vector<1x128xf32>
    %11 = vector.broadcast %10 : vector<1x128xf32> to vector<16x128xf32>
    %12 = arith.mulf %9, %11 : vector<16x128xf32>
    %c0_11 = arith.constant 0 : index
    %c0_12 = arith.constant 0 : index
    %13 = vector.load %arg6[%c0_11, %c0_12] : memref<1x128xf32, #tpu.memory_space<vmem>>, vector<1x128xf32>
    %14 = vector.broadcast %13 : vector<1x128xf32> to vector<16x128xf32>
    %15 = arith.addf %12, %14 : vector<16x128xf32>
    %16 = arith.addf %7, %15 : vector<16x128xf32>
    %cst = arith.constant 0.000000e+00 : f32
    %17 = vector.broadcast %cst : f32 to vector<16x128xf32>
    %18 = arith.maximumf %16, %17 : vector<16x128xf32>
    %c0_13 = arith.constant 0 : index
    %c0_14 = arith.constant 0 : index
    %c0_15 = arith.constant 0 : index
    %19 = vector.load %arg7[%c0_13, %c0_14, %c0_15] : memref<1x16x128xf32, #tpu.memory_space<vmem>>, vector<1x16x128xf32>
    %20 = vector.shape_cast %19 : vector<1x16x128xf32> to vector<16x128xf32>
    %21 = vector.shape_cast %18 : vector<16x128xf32> to vector<1x16x128xf32>
    tpu.vector_store %arg7[%c0_13, %c0_14, %c0_15], %21 {strides = array<i32>} : memref<1x16x128xf32, #tpu.memory_space<vmem>>, vector<1x16x128xf32>,
    return
  }
  func.func @transform_0(%arg0: i32) -> (i32, i32, i32) {
    %c0_i32 = arith.constant 0 : i32
    %c0_i32_0 = arith.constant 0 : i32
    %c0_i32_1 = arith.constant 0 : i32
    return %arg0, %c0_i32, %c0_i32_0 : i32, i32, i32
  }
  func.func @transform_1(%arg0: i32) -> (i32, i32, i32) {
    %c0_i32 = arith.constant 0 : i32
    %c0_i32_0 = arith.constant 0 : i32
    %c0_i32_1 = arith.constant 0 : i32
    return %arg0, %c0_i32, %c0_i32_0 : i32, i32, i32
  }
  func.func @transform_2(%arg0: i32) -> (i32, i32) {
    %c0_i32 = arith.constant 0 : i32
    %c0_i32_0 = arith.constant 0 : i32
    %c0_i32_1 = arith.constant 0 : i32
    return %c0_i32, %c0_i32_0 : i32, i32
  }
  func.func @transform_3(%arg0: i32) -> (i32, i32) {
    %c0_i32 = arith.constant 0 : i32
    %c0_i32_0 = arith.constant 0 : i32
    %c0_i32_1 = arith.constant 0 : i32
    return %c0_i32, %c0_i32_0 : i32, i32
  }
  func.func @transform_4(%arg0: i32) -> (i32, i32) {
    %c0_i32 = arith.constant 0 : i32
    %c0_i32_0 = arith.constant 0 : i32
    %c0_i32_1 = arith.constant 0 : i32
    return %c0_i32, %c0_i32_0 : i32, i32
  }
  func.func @transform_5(%arg0: i32) -> (i32, i32) {
    %c0_i32 = arith.constant 0 : i32
    %c0_i32_0 = arith.constant 0 : i32
    %c0_i32_1 = arith.constant 0 : i32
    return %c0_i32, %c0_i32_0 : i32, i32
  }
  func.func @transform_6(%arg0: i32) -> (i32, i32, i32) {
    %c0_i32 = arith.constant 0 : i32
    %c0_i32_0 = arith.constant 0 : i32
    %c0_i32_1 = arith.constant 0 : i32
    return %arg0, %c0_i32, %c0_i32_0 : i32, i32, i32
  }
}

</mosaic_0001>

<llo_original>
// kernel: basic_block_forward.3
$region0: #{basic_block_forward.3}
  #allocation0 [shape = 'u32[]', space=smem, size = 0x4, offset = 0x4, fixed_abs, tag = 'smem constant byte address 0x4 - core index']
  #allocation1 [shape = 'u32[72,128]{1,0:T(1,128)}', space=vmem, size = 0x9000, scoped, tag = 'internal scratch']
  %s0 = inlined_call_operand.vmem [shape: f32[2,16,64], index: 0, kind: input, shape index: {}]
  %s1 = inlined_call_operand.vmem [shape: bf16[3,64,256], index: 1, kind: input, shape index: {}]
  %s2 = inlined_call_operand.vmem [shape: f32[2,16,128], index: 2, kind: output, shape index: {0}]
  %s3 = inlined_call_operand.vmem [shape: f32[2,16,128], index: 3, kind: output, shape index: {1}]
  %s4 = inlined_call_operand.vmem [shape: f32[2,4,128], index: 4, kind: output, shape index: {2}]
  %5 = xla_tuple %s2, %s3, %s4
  %s6 = sld [smem:[#allocation0]]
  $region57: #{basic_block_forward.3} parent=0
    _
  %s8 = ssub.s32 1, %s6
  %s9 = scalar_select 0, %s8, %s6
  loop: start=0, step=1, limit=4
  $region2: #{basic_block_forward.3} parent=0 // loop_pre_header
    _
  $region3: #{basic_block_forward.3} parent=0 // loop_header
    %s11 = sphi 0, %s15
    %p12 = scmp.ge.s32.totalorder %s11, 4
    %s21 = sphi 0, %s23
    %s24 = sphi 0, %s21
    %s25 = sphi 0, %s24
    %s41 = sphi 0, %s25
    %s45 = sphi 0, %s45
    %s47 = sphi 0, %s45
    %s48 = sphi 0, %s47
    %s62 = sphi 0, %s48
    %s68 = sphi 0, %s70
    %s71 = sphi 0, %s68
    %s72 = sphi 0, %s71
    %s88 = sphi 0, %s72
    %s94 = sphi 0, %s96
    %s97 = sphi 0, %s94
    %s98 = sphi 0, %s97
    %s114 = sphi 0, %s98
    %s120 = sphi 0, %s122
    %s123 = sphi 0, %s120
    %s124 = sphi 0, %s123
    %s140 = sphi 0, %s124
  $region4: #{basic_block_forward.3} parent=0 // loop_header_branch
    %14 = sbr.rel (%p12) target = $region8
  $region5: #{basic_block_forward.3} parent=0 // loop_body
    %s16 = ssub.s32 %s11, 1
    %s17 = ssub.s32 %s11, 2
    %s18 = sadd.s32 %s11, 1
    %s19 = ssub.s32 %s11, %s18
    %p20 = scmp.eq.s32.totalorder %s19, 0
    %s22 = sadd.s32 %s21, 1
    %s23 = scalar_select %p20, %s21, %s22
    %p26 = pneg %p20
    %p27 = scmp.eq.s32.totalorder %s11, 1
    %p28 = por %p26, %p27
    %p29 = scmp.ne.s32.totalorder %s21, %s24
    %p30 = scmp.eq.s32.totalorder %s11, 0
    %p31 = por %p29, %p30
    %p32 = scmp.ne.s32.totalorder %s21, %s24
    %p33 = scmp.eq.s32.totalorder %s16, 1
    %p34 = por %p32, %p33
    %p35 = scmp.ne.s32.totalorder %s24, %s25
    %p36 = scmp.eq.s32.totalorder %s16, 0
    %p37 = por %p35, %p36
    %p38 = scmp.ne.s32.totalorder %s24, %s25
    %p39 = scmp.eq.s32.totalorder %s17, 1
    %p40 = por %p38, %p39
    %p42 = scmp.ne.s32.totalorder %s25, %s41
    %p43 = scmp.eq.s32.totalorder %s17, 0
    %p44 = por %p42, %p43
    %s46 = sadd.s32 %s45, 1
    %p49 = scmp.eq.s32.totalorder %s11, 1
    %p50 = scmp.ne.s32.totalorder %s45, %s47
    %p51 = scmp.eq.s32.totalorder %s11, 0
    %p52 = por %p50, %p51
    %p53 = scmp.ne.s32.totalorder %s45, %s47
    %p54 = scmp.eq.s32.totalorder %s16, 1
    %p55 = por %p53, %p54
    %p56 = scmp.ne.s32.totalorder %s47, %s48
    %p57 = scmp.eq.s32.totalorder %s16, 0
    %p58 = por %p56, %p57
    %p59 = scmp.ne.s32.totalorder %s47, %s48
    %p60 = scmp.eq.s32.totalorder %s17, 1
    %p61 = por %p59, %p60
    %p63 = scmp.ne.s32.totalorder %s48, %s62
    %p64 = scmp.eq.s32.totalorder %s17, 0
    %p65 = por %p63, %p64
    %s66 = ssub.s32 %s11, %s18
    %p67 = scmp.eq.s32.totalorder %s66, 0
    %s69 = sadd.s32 %s68, 1
    %s70 = scalar_select %p67, %s68, %s69
    %p73 = pneg %p67
    %p74 = scmp.eq.s32.totalorder %s11, 1
    %p75 = por %p73, %p74
    %p76 = scmp.ne.s32.totalorder %s68, %s71
    %p77 = scmp.eq.s32.totalorder %s11, 0
    %p78 = por %p76, %p77
    %p79 = scmp.ne.s32.totalorder %s68, %s71
    %p80 = scmp.eq.s32.totalorder %s16, 1
    %p81 = por %p79, %p80
    %p82 = scmp.ne.s32.totalorder %s71, %s72
    %p83 = scmp.eq.s32.totalorder %s16, 0
    %p84 = por %p82, %p83
    %p85 = scmp.ne.s32.totalorder %s71, %s72
    %p86 = scmp.eq.s32.totalorder %s17, 1
    %p87 = por %p85, %p86
    %p89 = scmp.ne.s32.totalorder %s72, %s88
    %p90 = scmp.eq.s32.totalorder %s17, 0
    %p91 = por %p89, %p90
    %s92 = ssub.s32 %s11, %s18
    %p93 = scmp.eq.s32.totalorder %s92, 0
    %s95 = sadd.s32 %s94, 1
    %s96 = scalar_select %p93, %s94, %s95
    %p99 = pneg %p93
    %p100 = scmp.eq.s32.totalorder %s11, 1
    %p101 = por %p99, %p100
    %p102 = scmp.ne.s32.totalorder %s94, %s97
    %p103 = scmp.eq.s32.totalorder %s11, 0
    %p104 = por %p102, %p103
    %p105 = scmp.ne.s32.totalorder %s94, %s97
    %p106 = scmp.eq.s32.totalorder %s16, 1
    %p107 = por %p105, %p106
    %p108 = scmp.ne.s32.totalorder %s97, %s98
    %p109 = scmp.eq.s32.totalorder %s16, 0
    %p110 = por %p108, %p109
    %p111 = scmp.ne.s32.totalorder %s97, %s98
    %p112 = scmp.eq.s32.totalorder %s17, 1
    %p113 = por %p111, %p112
    %p115 = scmp.ne.s32.totalorder %s98, %s114
    %p116 = scmp.eq.s32.totalorder %s17, 0
    %p117 = por %p115, %p116
    %s118 = ssub.s32 %s11, %s18
    %p119 = scmp.eq.s32.totalorder %s118, 0
    %s121 = sadd.s32 %s120, 1
    %s122 = scalar_select %p119, %s120, %s121
    %p125 = pneg %p119
    %p126 = scmp.eq.s32.totalorder %s11, 1
    %p127 = por %p125, %p126
    %p128 = scmp.ne.s32.totalorder %s120, %s123
    %p129 = scmp.eq.s32.totalorder %s11, 0
    %p130 = por %p128, %p129
    %p131 = scmp.ne.s32.totalorder %s120, %s123
    %p132 = scmp.eq.s32.totalorder %s16, 1
    %p133 = por %p131, %p132
    %p134 = scmp.ne.s32.totalorder %s123, %s124
    %p135 = scmp.eq.s32.totalorder %s16, 0
    %p136 = por %p134, %p135
    %p137 = scmp.ne.s32.totalorder %s123, %s124
    %p138 = scmp.eq.s32.totalorder %s17, 1
    %p139 = por %p137, %p138
    %p141 = scmp.ne.s32.totalorder %s124, %s140
    %p142 = scmp.eq.s32.totalorder %s17, 0
    %p143 = por %p141, %p142
    %p144 = scmp.le.s32.totalorder 1, %s11
    %p145 = scmp.lt.s32.totalorder %s11, 3
    %p146 = pnand %p144, %p145
    %p147 = pneg %p146
    // Predicated region
    $region9: #{basic_block_forward.3} parent=5 // pred_check
      _
    $region10: #{basic_block_forward.3} parent=5 // pred_check_branch
      %149 = sbr.rel (%p146) target = $region12
    $region11: #{basic_block_forward.3} parent=5 // pred_region
      %s150 = ssub.s32 %s11, 1
      // Predicated region
      $region13: #{basic_block_forward.3} parent=11 // pred_check
        %p151 = pneg %p58
      $region14: #{basic_block_forward.3} parent=11 // pred_check_branch
        %153 = sbr.rel (%p151) target = $region16
      $region15: #{basic_block_forward.3} parent=11 // pred_region
        _
      $region16: #{basic_block_forward.3} parent=11 // pred_fallthru
        _
    $region12: #{basic_block_forward.3} parent=5 // pred_fallthru
      _
    %p154 = scmp.lt.s32.totalorder %s11, 2
    // Predicated region
    $region17: #{basic_block_forward.3} parent=5 // pred_check
      %p155 = pneg %p154
    $region18: #{basic_block_forward.3} parent=5 // pred_check_branch
      %157 = sbr.rel (%p155) target = $region20
    $region19: #{basic_block_forward.3} parent=5 // pred_region
      // Predicated region
      $region21: #{basic_block_forward.3} parent=19 // pred_check
        %p158 = pneg %p31
      $region22: #{basic_block_forward.3} parent=19 // pred_check_branch
        %160 = sbr.rel (%p158) target = $region24
      $region23: #{basic_block_forward.3} parent=19 // pred_region
        %p161 = scmp.lt.s32.totalorder %s11, 1
        %s162 = scalar_select %p161, %s11, 1
        %s163 = smul.addr %s162, 2
        %s164 = smul.addr %s163, 8
        %s165 = scalar_lea.vmem %s0, %s164
      $region24: #{basic_block_forward.3} parent=19 // pred_fallthru
        _
    $region20: #{basic_block_forward.3} parent=5 // pred_fallthru
      _
    %p166 = scmp.le.s32.totalorder 1, %s11
    %p167 = scmp.lt.s32.totalorder %s11, 3
    %p168 = pnand %p166, %p167
    %p169 = pneg %p168
    // Predicated region
    $region25: #{basic_block_forward.3} parent=5 // pred_check
      _
    $region26: #{basic_block_forward.3} parent=5 // pred_check_branch
      %171 = sbr.rel (%p168) target = $region28
    $region27: #{basic_block_forward.3} parent=5 // pred_region
      %s172 = ssub.s32 %s11, 1
      %p173 = scmp.lt.s32.totalorder %s16, 1
      %s174 = scalar_select %p173, %s16, 1
      %s175 = smul.addr %s174, 2
      %s176 = smul.addr %s175, 8
      %s177 = scalar_lea.vmem %s0, %s176
      %p178 = pneg %p37
      %p179 = pneg %p34
      %p180 = pneg %p58
      %p181 = pneg %p55
      %p182 = pneg %p84
      %p183 = pneg %p81
      %p184 = scmp.lt.s32.totalorder %s16, 1
      %s185 = scalar_select %p184, %s16, 1
      %s186 = smul.addr %s185, 2
      %s187 = smul.addr %s186, 8
      %s188 = scalar_lea.vmem %s2, %s187
      %p189 = pneg %p110
      %p190 = pneg %p107
      %p191 = scmp.lt.s32.totalorder %s16, 1
      %s192 = scalar_select %p191, %s16, 1
      %s193 = smul.addr %s192, 2
      %s194 = smul.addr %s193, 8
      %s195 = scalar_lea.vmem %s3, %s194
      %p196 = pneg %p136
      %p197 = pneg %p133
      %p198 = scmp.lt.s32.totalorder %s16, 1
      %s199 = scalar_select %p198, %s16, 1
      %s200 = smul.addr %s199, 4
      %s201 = scalar_lea.vmem %s4, %s200
      %p202 = scmp.lt.s32.totalorder %s16, 1
      %s203 = scalar_select %p202, %s16, 1
      %s204 = smul.addr %s203, 2
      %s205 = smul.addr %s204, 8
      %s206 = scalar_lea.vmem %s0, %s205
      %p207 = scmp.lt.s32.totalorder %s16, 1
      %s208 = scalar_select %p207, %s16, 1
      %s209 = smul.addr %s208, 2
      %s210 = smul.addr %s209, 8
      %s211 = scalar_lea.vmem %s2, %s210
      %p212 = scmp.lt.s32.totalorder %s16, 1
      %s213 = scalar_select %p212, %s16, 1
      %s214 = smul.addr %s213, 2
      %s215 = smul.addr %s214, 8
      %s216 = scalar_lea.vmem %s3, %s215
      %p217 = scmp.lt.s32.totalorder %s16, 1
      %s218 = scalar_select %p217, %s16, 1
      %s219 = smul.addr %s218, 4
      %s220 = scalar_lea.vmem %s4, %s219
      %v222 = vld [vmem:[%s206] sm:$0xff]
      %v223 = vld [vmem:[%s206 + $0x8] sm:$0xff]
      %vm226 = vcmask 1040384
      %v227 = vrot.slane %v222, 7
      %v228 = vrot.slane %v223, 7
      %v229 = vsel %vm226, %v227, %v228
      %v233 = vsel %vm226, 0.0, %v227
      %v234 = vsel %vm226, %v228, 0.0
      %v235 = vpack.c.bf16 %v229, %v233
      %v236 = vld [vmem:[%s1] sm:$0xff]
      %v237 = vld [vmem:[%s1 + $0x8] sm:$0xff]
      %v238 = vld [vmem:[%s1 + $0x10] sm:$0xff]
      %v239 = vld [vmem:[%s1 + $0x18] sm:$0xff]
      %v240 = vld [vmem:[%s1 + $0x20] sm:$0xff]
      %v241 = vld [vmem:[%s1 + $0x28] sm:$0xff]
      %v242 = vld [vmem:[%s1 + $0x30] sm:$0xff]
      %v243 = vld [vmem:[%s1 + $0x38] sm:$0xff]
      %v244 = vpack.c.bf16 %v234, %v234
      %s245 = scalar_lea.vmem %s1, 64
      %v246 = vld [vmem:[%s245] sm:$0xff]
      %v247 = vld [vmem:[%s245 + $0x8] sm:$0xff]
      %v248 = vld [vmem:[%s245 + $0x10] sm:$0xff]
      %v249 = vld [vmem:[%s245 + $0x18] sm:$0xff]
      %v250 = vld [vmem:[%s245 + $0x20] sm:$0xff]
      %v251 = vld [vmem:[%s245 + $0x28] sm:$0xff]
      %v252 = vld [vmem:[%s245 + $0x30] sm:$0xff]
      %v253 = vld [vmem:[%s245 + $0x38] sm:$0xff]
      %vm254 = vsmask.f32 7424
      %v256 = vshrl.u32 %v235, 16
      %v258 = vshll.u32 %v235, 16
      %v260 = vrot.slane %v258, 1
      %v261 = vor.u32 %v256, %v260
      %v263 = vshll.u32 %v244, 16
      %v265 = vrot.slane %v263, 1
      %v266 = vsel %vm254, %v261, %v265
      %v275 = vunpack.c.l.b16 %v246
      %v276 = vunpack.c.h.b16 %v246
      %v277 = vunpack.c.l.b16 %v247
      %v278 = vunpack.c.h.b16 %v247
      %v279 = vunpack.c.l.b16 %v248
      %v280 = vunpack.c.h.b16 %v248
      %v281 = vunpack.c.l.b16 %v249
      %v282 = vunpack.c.h.b16 %v249
      %v283 = vunpack.c.l.b16 %v250
      %v284 = vunpack.c.h.b16 %v250
      %v285 = vunpack.c.l.b16 %v251
      %v286 = vunpack.c.h.b16 %v251
      %v287 = vunpack.c.l.b16 %v252
      %v288 = vunpack.c.h.b16 %v252
      %v289 = vunpack.c.l.b16 %v253
      %v290 = vunpack.c.h.b16 %v253
      %v291 = vpack.c.b16 %v277, %v275
      %v292 = vpack.c.b16 %v278, %v276
      %v293 = vpack.c.b16 %v281, %v279
      %v294 = vpack.c.b16 %v282, %v280
      %v295 = vpack.c.b16 %v285, %v283
      %v296 = vpack.c.b16 %v286, %v284
      %v297 = vpack.c.b16 %v289, %v287
      %v298 = vpack.c.b16 %v290, %v288
      %vm307 = vcmask 523264
      %v309 = vsel %vm307, %v266, 0
      %311 = vmatpush.bf16.msra.mxu0 0
      %312 = vmatpush.bf16.msra.mxu0 0
      %313 = vmatpush.bf16.msra.mxu0 0
      %314 = vmatpush.bf16.msra.mxu0 0
      %315 = vmatpush.bf16.msra.mxu0 %v297
      %316 = vmatpush.bf16.msra.mxu0 %v295
      %317 = vmatpush.bf16.msra.mxu0 %v293
      %318 = vmatpush.bf16.msra.mxu0 %v291
      %319 = vmatmul.bf16.gmra.mxu0 %v309
      %v320 = vpop.f32.mrf.mxu0
      %v321 = vadd.f32 0.0, %v320
      %v322 = vpop.f32.mrf.mxu0
      %v323 = vadd.f32 0.0, %v322
      %324 = vdwg.mxu0
      %325 = vmatpush.bf16.msra.mxu0 0
      %326 = vmatpush.bf16.msra.mxu0 0
      %327 = vmatpush.bf16.msra.mxu0 0
      %328 = vmatpush.bf16.msra.mxu0 0
      %329 = vmatpush.bf16.msra.mxu0 %v298
      %330 = vmatpush.bf16.msra.mxu0 %v296
      %331 = vmatpush.bf16.msra.mxu0 %v294
      %332 = vmatpush.bf16.msra.mxu0 %v292
      %333 = vmatmul.bf16.gmra.mxu0 %v309
      %v334 = vpop.f32.mrf.mxu0
      %v335 = vadd.f32 0.0, %v334
      %v336 = vpop.f32.mrf.mxu0
      %v337 = vadd.f32 0.0, %v336
      %338 = vdwg.mxu0
      %v347 = vunpack.c.l.b16 %v236
      %v348 = vunpack.c.h.b16 %v236
      %v349 = vunpack.c.l.b16 %v237
      %v350 = vunpack.c.h.b16 %v237
      %v351 = vunpack.c.l.b16 %v238
      %v352 = vunpack.c.h.b16 %v238
      %v353 = vunpack.c.l.b16 %v239
      %v354 = vunpack.c.h.b16 %v239
      %v355 = vunpack.c.l.b16 %v240
      %v356 = vunpack.c.h.b16 %v240
      %v357 = vunpack.c.l.b16 %v241
      %v358 = vunpack.c.h.b16 %v241
      %v359 = vunpack.c.l.b16 %v242
      %v360 = vunpack.c.h.b16 %v242
      %v361 = vunpack.c.l.b16 %v243
      %v362 = vunpack.c.h.b16 %v243
      %v363 = vpack.c.b16 %v349, %v347
      %v364 = vpack.c.b16 %v350, %v348
      %v365 = vpack.c.b16 %v353, %v351
      %v366 = vpack.c.b16 %v354, %v352
      %v367 = vpack.c.b16 %v357, %v355
      %v368 = vpack.c.b16 %v358, %v356
      %v369 = vpack.c.b16 %v361, %v359
      %v370 = vpack.c.b16 %v362, %v360
      %v379 = vsel %vm307, %v235, 0
      %381 = vmatpush.bf16.msra.mxu0 0
      %382 = vmatpush.bf16.msra.mxu0 0
      %383 = vmatpush.bf16.msra.mxu0 0
      %384 = vmatpush.bf16.msra.mxu0 0
      %385 = vmatpush.bf16.msra.mxu0 %v369
      %386 = vmatpush.bf16.msra.mxu0 %v367
      %387 = vmatpush.bf16.msra.mxu0 %v365
      %388 = vmatpush.bf16.msra.mxu0 %v363
      %389 = vmatmul.bf16.gmra.mxu0 %v379
      %v390 = vpop.f32.mrf.mxu0
      %v391 = vadd.f32 %v321, %v390
      %v392 = vpop.f32.mrf.mxu0
      %v393 = vadd.f32 %v323, %v392
      %394 = vdwg.mxu0
      %395 = vmatpush.bf16.msra.mxu0 0
      %396 = vmatpush.bf16.msra.mxu0 0
      %397 = vmatpush.bf16.msra.mxu0 0
      %398 = vmatpush.bf16.msra.mxu0 0
      %399 = vmatpush.bf16.msra.mxu0 %v370
      %400 = vmatpush.bf16.msra.mxu0 %v368
      %401 = vmatpush.bf16.msra.mxu0 %v366
      %402 = vmatpush.bf16.msra.mxu0 %v364
      %403 = vmatmul.bf16.gmra.mxu0 %v379
      %v404 = vpop.f32.mrf.mxu0
      %v405 = vadd.f32 %v335, %v404
      %v406 = vpop.f32.mrf.mxu0
      %v407 = vadd.f32 %v337, %v406
      %408 = vdwg.mxu0
      %s409 = scalar_lea.vmem %s1, 128
      %v410 = vld [vmem:[%s409] sm:$0xff]
      %v411 = vld [vmem:[%s409 + $0x8] sm:$0xff]
      %v412 = vld [vmem:[%s409 + $0x10] sm:$0xff]
      %v413 = vld [vmem:[%s409 + $0x18] sm:$0xff]
      %v414 = vld [vmem:[%s409 + $0x20] sm:$0xff]
      %v415 = vld [vmem:[%s409 + $0x28] sm:$0xff]
      %v416 = vld [vmem:[%s409 + $0x30] sm:$0xff]
      %v417 = vld [vmem:[%s409 + $0x38] sm:$0xff]
      %vm420 = vcmask 1046528
      %v421 = vrot.slane %v235, 1
      %v422 = vrot.slane %v244, 1
      %v423 = vsel %vm420, %v421, %v422
      %v432 = vunpack.c.l.b16 %v410
      %v433 = vunpack.c.h.b16 %v410
      %v434 = vunpack.c.l.b16 %v411
      %v435 = vunpack.c.h.b16 %v411
      %v436 = vunpack.c.l.b16 %v412
      %v437 = vunpack.c.h.b16 %v412
      %v438 = vunpack.c.l.b16 %v413
      %v439 = vunpack.c.h.b16 %v413
      %v440 = vunpack.c.l.b16 %v414
      %v441 = vunpack.c.h.b16 %v414
      %v442 = vunpack.c.l.b16 %v415
      %v443 = vunpack.c.h.b16 %v415
      %v444 = vunpack.c.l.b16 %v416
      %v445 = vunpack.c.h.b16 %v416
      %v446 = vunpack.c.l.b16 %v417
      %v447 = vunpack.c.h.b16 %v417
      %v448 = vpack.c.b16 %v434, %v432
      %v449 = vpack.c.b16 %v435, %v433
      %v450 = vpack.c.b16 %v438, %v436
      %v451 = vpack.c.b16 %v439, %v437
      %v452 = vpack.c.b16 %v442, %v440
      %v453 = vpack.c.b16 %v443, %v441
      %v454 = vpack.c.b16 %v446, %v444
      %v455 = vpack.c.b16 %v447, %v445
      %v465 = vsel %vm307, %v423, 0
      %467 = vmatpush.bf16.msra.mxu0 0
      %468 = vmatpush.bf16.msra.mxu0 0
      %469 = vmatpush.bf16.msra.mxu0 0
      %470 = vmatpush.bf16.msra.mxu0 0
      %471 = vmatpush.bf16.msra.mxu0 %v454
      %472 = vmatpush.bf16.msra.mxu0 %v452
      %473 = vmatpush.bf16.msra.mxu0 %v450
      %474 = vmatpush.bf16.msra.mxu0 %v448
      %475 = vmatmul.bf16.gmra.mxu0 %v465
      %v476 = vpop.f32.mrf.mxu0
      %v477 = vadd.f32 0.0, %v476
      %v478 = vpop.f32.mrf.mxu0
      %v479 = vadd.f32 0.0, %v478
      %480 = vdwg.mxu0
      %481 = vmatpush.bf16.msra.mxu0 0
      %482 = vmatpush.bf16.msra.mxu0 0
      %483 = vmatpush.bf16.msra.mxu0 0
      %484 = vmatpush.bf16.msra.mxu0 0
      %485 = vmatpush.bf16.msra.mxu0 %v455
      %486 = vmatpush.bf16.msra.mxu0 %v453
      %487 = vmatpush.bf16.msra.mxu0 %v451
      %488 = vmatpush.bf16.msra.mxu0 %v449
      %489 = vmatmul.bf16.gmra.mxu0 %v465
      %v490 = vpop.f32.mrf.mxu0
      %v491 = vadd.f32 0.0, %v490
      %v492 = vpop.f32.mrf.mxu0
      %v493 = vadd.f32 0.0, %v492
      %494 = vdwg.mxu0
      %v495 = vadd.f32 %v391, %v477
      %v496 = vadd.f32 %v405, %v491
      %v497 = vadd.f32 %v393, %v479
      %v498 = vadd.f32 %v407, %v493
      %499 = vst [vmem:[%s211] sm:$0xff] %v495
      %500 = vst [vmem:[%s211 + $0x8] sm:$0xff] %v497
      %501 = vst [vmem:[%s216] sm:$0xff] %v496
      %502 = vst [vmem:[%s216 + $0x8] sm:$0xff] %v498
      %v503 = vadd.f32 %v495, %v497
      %v504 = vrot.slane %v503, 4
      %v505 = vadd.f32 %v503, %v504
      %v506 = vrot.slane %v505, 2
      %v507 = vadd.f32 %v505, %v506
      %v508 = vrot.slane %v507, 1
      %v509 = vadd.f32 %v507, %v508
      %v510 = vmul.f32 %v495, %v495
      %v511 = vmul.f32 %v497, %v497
      %v512 = vadd.f32 %v510, %v511
      %v513 = vrot.slane %v512, 4
      %v514 = vadd.f32 %v512, %v513
      %v515 = vrot.slane %v514, 2
      %v516 = vadd.f32 %v514, %v515
      %v517 = vrot.slane %v516, 1
      %v518 = vadd.f32 %v516, %v517
      %v519 = vadd.f32 %v496, %v498
      %v520 = vrot.slane %v519, 4
      %v521 = vadd.f32 %v519, %v520
      %v522 = vrot.slane %v521, 2
      %v523 = vadd.f32 %v521, %v522
      %v524 = vrot.slane %v523, 1
      %v525 = vadd.f32 %v523, %v524
      %v526 = vmul.f32 %v496, %v496
      %v527 = vmul.f32 %v498, %v498
      %v528 = vadd.f32 %v526, %v527
      %v529 = vrot.slane %v528, 4
      %v530 = vadd.f32 %v528, %v529
      %v531 = vrot.slane %v530, 2
      %v532 = vadd.f32 %v530, %v531
      %v533 = vrot.slane %v532, 1
      %v534 = vadd.f32 %v532, %v533
      %v535 = vsel %vm226, %v509, %v518
      %vm536 = vcmask 1041408
      %v537 = vsel %vm536, %v535, %v525
      %vm538 = vcmask 1042432
      %v539 = vsel %vm538, %v537, %v534
      %540 = vst [vmem:[%s220] sm:$0xf] %v539
      %p541 = scmp.lt.s32.totalorder %s16, 1
      %s542 = scalar_select %p541, %s16, 1
      %s543 = smul.addr %s542, 2
      %s544 = smul.addr %s543, 8
      %s545 = scalar_lea.vmem %s2, %s544
      %p546 = scmp.lt.s32.totalorder %s16, 1
      %s547 = scalar_select %p546, %s16, 1
      %s548 = smul.addr %s547, 2
      %s549 = smul.addr %s548, 8
      %s550 = scalar_lea.vmem %s3, %s549
      %p551 = scmp.lt.s32.totalorder %s16, 1
      %s552 = scalar_select %p551, %s16, 1
      %s553 = smul.addr %s552, 4
      %s554 = scalar_lea.vmem %s4, %s553
      // Predicated region
      $region29: #{basic_block_forward.3} parent=27 // pred_check
        %p555 = pneg %p81
      $region30: #{basic_block_forward.3} parent=27 // pred_check_branch
        %557 = sbr.rel (%p555) target = $region32
      $region31: #{basic_block_forward.3} parent=27 // pred_region
        _
      $region32: #{basic_block_forward.3} parent=27 // pred_fallthru
        _
      // Predicated region
      $region33: #{basic_block_forward.3} parent=27 // pred_check
        %p558 = pneg %p107
      $region34: #{basic_block_forward.3} parent=27 // pred_check_branch
        %560 = sbr.rel (%p558) target = $region36
      $region35: #{basic_block_forward.3} parent=27 // pred_region
        _
      $region36: #{basic_block_forward.3} parent=27 // pred_fallthru
        _
      // Predicated region
      $region37: #{basic_block_forward.3} parent=27 // pred_check
        %p561 = pneg %p133
      $region38: #{basic_block_forward.3} parent=27 // pred_check_branch
        %563 = sbr.rel (%p561) target = $region40
      $region39: #{basic_block_forward.3} parent=27 // pred_region
        _
      $region40: #{basic_block_forward.3} parent=27 // pred_fallthru
        _
    $region28: #{basic_block_forward.3} parent=5 // pred_fallthru
      _
    %p564 = scmp.le.s32.totalorder 2, %s11
    // Predicated region
    $region41: #{basic_block_forward.3} parent=5 // pred_check
      %p565 = pneg %p564
    $region42: #{basic_block_forward.3} parent=5 // pred_check_branch
      %567 = sbr.rel (%p565) target = $region44
    $region43: #{basic_block_forward.3} parent=5 // pred_region
      %s568 = ssub.s32 %s11, 2
      // Predicated region
      $region45: #{basic_block_forward.3} parent=43 // pred_check
        %p569 = pneg %p87
      $region46: #{basic_block_forward.3} parent=43 // pred_check_branch
        %571 = sbr.rel (%p569) target = $region48
      $region47: #{basic_block_forward.3} parent=43 // pred_region
        %p572 = scmp.lt.s32.totalorder %s17, 1
        %s573 = scalar_select %p572, %s17, 1
        %s574 = smul.addr %s573, 2
        %s575 = smul.addr %s574, 8
        %s576 = scalar_lea.vmem %s2, %s575
      $region48: #{basic_block_forward.3} parent=43 // pred_fallthru
        _
      // Predicated region
      $region49: #{basic_block_forward.3} parent=43 // pred_check
        %p577 = pneg %p113
      $region50: #{basic_block_forward.3} parent=43 // pred_check_branch
        %579 = sbr.rel (%p577) target = $region52
      $region51: #{basic_block_forward.3} parent=43 // pred_region
        %p580 = scmp.lt.s32.totalorder %s17, 1
        %s581 = scalar_select %p580, %s17, 1
        %s582 = smul.addr %s581, 2
        %s583 = smul.addr %s582, 8
        %s584 = scalar_lea.vmem %s3, %s583
      $region52: #{basic_block_forward.3} parent=43 // pred_fallthru
        _
      // Predicated region
      $region53: #{basic_block_forward.3} parent=43 // pred_check
        %p585 = pneg %p139
      $region54: #{basic_block_forward.3} parent=43 // pred_check_branch
        %587 = sbr.rel (%p585) target = $region56
      $region55: #{basic_block_forward.3} parent=43 // pred_region
        %p588 = scmp.lt.s32.totalorder %s17, 1
        %s589 = scalar_select %p588, %s17, 1
        %s590 = smul.addr %s589, 4
        %s591 = scalar_lea.vmem %s4, %s590
      $region56: #{basic_block_forward.3} parent=43 // pred_fallthru
        _
    $region44: #{basic_block_forward.3} parent=5 // pred_fallthru
      _
  $region6: #{basic_block_forward.3} parent=0 // loop_footer
    %s15 = sadd.s32 1, %s11
  $region7: #{basic_block_forward.3} parent=0 // loop_footer_branch
    %10 = sbr.rel target = $region3
  $region8: #{basic_block_forward.3} parent=0 // loop_exit
    _

// kernel: tile.33
$region0: #{tile.33}
  #allocation0 [shape = 's32[1]{0}', space=sflag, size = 0x4, scoped, tag = 'scoped memory for tile.33']
  %s0 = inlined_call_operand.vmem [shape: f32[8], index: 0, kind: input, shape index: {}]
  %s1 = inlined_call_operand.vmem [shape: f32[16,8], index: 1, kind: output, shape index: {}]
  // Predicated region
  $region2: #{tile.33} parent=0 // pred_check
    _
  $region3: #{tile.33} parent=0 // pred_check_branch
    %3 = sbr.rel (0) target = $region5
  $region4: #{tile.33} parent=0 // pred_region
    _
  $region5: #{tile.33} parent=0 // pred_fallthru
    _
  %v4 = vld [vmem:[%s0] ss:$0 sm:$0xff]
  %5 = vst [vmem:[%s1] sm:$0xff] %v4
  %s6 = scalar_lea.vmem %s1, 8
  %7 = vst [vmem:[%s6] sm:$0xff] %v4

// kernel: tile.34
$region0: #{tile.34}
  %s0 = inlined_call_operand.vmem [shape: f32[16,8], index: 0, kind: input, shape index: {}]
  %s1 = inlined_call_operand.vmem [shape: f32[1,128], index: 1, kind: output, shape index: {}]
  $region1: #{tile.34} parent=0
    #allocation0 [shape = 'u8[4096]{0}', space=vmem, size = 0x1000, scoped, tag = 'scoped mem for output reshape']
    %v2 = vld [vmem:[%s0] sm:$0x1]
    %vm3 = vcmask 64512
    %4 = vst.msk [vmem:[#allocation0] sm:$0x1] %vm3, %v2
    %s5 = scalar_lea.vmem %s0, 15
    %v6 = vld [vmem:[%s5] sm:$0x1]
    %7 = vrot.lane.b32.xlu0 %v6, 120
    %v8 = vpop.permute.xlu0 %7
    %vm9 = vcmask 1048512
    %10 = vst.msk [vmem:[#allocation0] sm:$0x1] %vm9, %v8
    %s11 = scalar_lea.vmem %s0, 14
    %v12 = vld [vmem:[%s11] sm:$0x1]
    %13 = vrot.lane.b32.xlu0 %v12, 112
    %v14 = vpop.permute.xlu0 %13
    %vm15 = vcmask 982912
    %16 = vst.msk [vmem:[#allocation0] sm:$0x1] %vm15, %v14
    %s17 = scalar_lea.vmem %s0, 13
    %v18 = vld [vmem:[%s17] sm:$0x1]
    %19 = vrot.lane.b32.xlu0 %v18, 104
    %v20 = vpop.permute.xlu0 %19
    %vm21 = vcmask 917312
    %22 = vst.msk [vmem:[#allocation0] sm:$0x1] %vm21, %v20
    %s23 = scalar_lea.vmem %s0, 12
    %v24 = vld [vmem:[%s23] sm:$0x1]
    %25 = vrot.lane.b32.xlu0 %v24, 96
    %v26 = vpop.permute.xlu0 %25
    %vm27 = vcmask 851712
    %28 = vst.msk [vmem:[#allocation0] sm:$0x1] %vm27, %v26
    %s29 = scalar_lea.vmem %s0, 11
    %v30 = vld [vmem:[%s29] sm:$0x1]
    %31 = vrot.lane.b32.xlu0 %v30, 88
    %v32 = vpop.permute.xlu0 %31
    %vm33 = vcmask 786112
    %34 = vst.msk [vmem:[#allocation0] sm:$0x1] %vm33, %v32
    %s35 = scalar_lea.vmem %s0, 10
    %v36 = vld [vmem:[%s35] sm:$0x1]
    %37 = vrot.lane.b32.xlu0 %v36, 80
    %v38 = vpop.permute.xlu0 %37
    %vm39 = vcmask 720512
    %40 = vst.msk [vmem:[#allocation0] sm:$0x1] %vm39, %v38
    %s41 = scalar_lea.vmem %s0, 9
    %v42 = vld [vmem:[%s41] sm:$0x1]
    %43 = vrot.lane.b32.xlu0 %v42, 72
    %v44 = vpop.permute.xlu0 %43
    %vm45 = vcmask 654912
    %46 = vst.msk [vmem:[#allocation0] sm:$0x1] %vm45, %v44
    %s47 = scalar_lea.vmem %s0, 8
    %v48 = vld [vmem:[%s47] sm:$0x1]
    %49 = vrot.lane.b32.xlu0 %v48, 64
    %v50 = vpop.permute.xlu0 %49
    %vm51 = vcmask 589312
    %52 = vst.msk [vmem:[#allocation0] sm:$0x1] %vm51, %v50
    %s53 = scalar_lea.vmem %s0, 7
    %v54 = vld [vmem:[%s53] sm:$0x1]
    %55 = vrot.lane.b32.xlu0 %v54, 56
    %v56 = vpop.permute.xlu0 %55
    %vm57 = vcmask 523712
    %58 = vst.msk [vmem:[#allocation0] sm:$0x1] %vm57, %v56
    %s59 = scalar_lea.vmem %s0, 6
    %v60 = vld [vmem:[%s59] sm:$0x1]
    %61 = vrot.lane.b32.xlu0 %v60, 48
    %v62 = vpop.permute.xlu0 %61
    %vm63 = vcmask 458112
    %64 = vst.msk [vmem:[#allocation0] sm:$0x1] %vm63, %v62
    %s65 = scalar_lea.vmem %s0, 5
    %v66 = vld [vmem:[%s65] sm:$0x1]
    %67 = vrot.lane.b32.xlu0 %v66, 40
    %v68 = vpop.permute.xlu0 %67
    %vm69 = vcmask 392512
    %70 = vst.msk [vmem:[#allocation0] sm:$0x1] %vm69, %v68
    %s71 = scalar_lea.vmem %s0, 4
    %v72 = vld [vmem:[%s71] sm:$0x1]
    %73 = vrot.lane.b32.xlu0 %v72, 32
    %v74 = vpop.permute.xlu0 %73
    %vm75 = vcmask 326912
    %76 = vst.msk [vmem:[#allocation0] sm:$0x1] %vm75, %v74
    %s77 = scalar_lea.vmem %s0, 3
    %v78 = vld [vmem:[%s77] sm:$0x1]
    %79 = vrot.lane.b32.xlu0 %v78, 24
    %v80 = vpop.permute.xlu0 %79
    %vm81 = vcmask 261312
    %82 = vst.msk [vmem:[#allocation0] sm:$0x1] %vm81, %v80
    %s83 = scalar_lea.vmem %s0, 2
    %v84 = vld [vmem:[%s83] sm:$0x1]
    %85 = vrot.lane.b32.xlu0 %v84, 16
    %v86 = vpop.permute.xlu0 %85
    %vm87 = vcmask 195712
    %88 = vst.msk [vmem:[#allocation0] sm:$0x1] %vm87, %v86
    %s89 = scalar_lea.vmem %s0, 1
    %v90 = vld [vmem:[%s89] sm:$0x1]
    %91 = vrot.lane.b32.xlu0 %v90, 8
    %v92 = vpop.permute.xlu0 %91
    %vm93 = vcmask 130112
    %94 = vst.msk [vmem:[#allocation0] sm:$0x1] %vm93, %v92
    %s96 = ssub.s32 2, 1
    %v97 = vld [vmem:[#allocation0] sm:%s96]
    %s99 = ssub.s32 2, 1
    %100 = vst [vmem:[%s1] sm:%s99] %v97

// kernel: basic_block_forward.4
$region0: #{basic_block_forward.4}
  #allocation0 [shape = 'u32[]', space=smem, size = 0x4, offset = 0x4, fixed_abs, tag = 'smem constant byte address 0x4 - core index']
  #allocation1 [shape = 'u32[72,128]{1,0:T(1,128)}', space=vmem, size = 0x9000, scoped, tag = 'internal scratch']
  %s0 = inlined_call_operand.vmem [shape: f32[2,16,128], index: 0, kind: input, shape index: {}]
  %s1 = inlined_call_operand.vmem [shape: f32[1,128], index: 1, kind: input, shape index: {}]
  %s2 = inlined_call_operand.vmem [shape: f32[1,128], index: 2, kind: input, shape index: {}]
  %s3 = inlined_call_operand.vmem [shape: bf16[3,128,128], index: 3, kind: input, shape index: {}]
  %s4 = inlined_call_operand.vmem [shape: f32[2,16,128], index: 4, kind: output, shape index: {0}]
  %s5 = inlined_call_operand.vmem [shape: f32[2,2,128], index: 5, kind: output, shape index: {1}]
  %6 = xla_tuple %s4, %s5
  %s7 = sld [smem:[#allocation0]]
  $region57: #{basic_block_forward.4} parent=0
    _
  %s9 = ssub.s32 1, %s7
  %s10 = scalar_select 0, %s9, %s7
  loop: start=0, step=1, limit=4
  $region2: #{basic_block_forward.4} parent=0 // loop_pre_header
    _
  $region3: #{basic_block_forward.4} parent=0 // loop_header
    %s12 = sphi 0, %s16
    %p13 = scmp.ge.s32.totalorder %s12, 4
    %s22 = sphi 0, %s24
    %s25 = sphi 0, %s22
    %s26 = sphi 0, %s25
    %s42 = sphi 0, %s26
    %s46 = sphi 0, %s46
    %s48 = sphi 0, %s46
    %s49 = sphi 0, %s48
    %s63 = sphi 0, %s49
    %s67 = sphi 0, %s67
    %s69 = sphi 0, %s67
    %s70 = sphi 0, %s69
    %s84 = sphi 0, %s70
    %s88 = sphi 0, %s88
    %s90 = sphi 0, %s88
    %s91 = sphi 0, %s90
    %s105 = sphi 0, %s91
    %s111 = sphi 0, %s113
    %s114 = sphi 0, %s111
    %s115 = sphi 0, %s114
    %s131 = sphi 0, %s115
    %s137 = sphi 0, %s139
    %s140 = sphi 0, %s137
    %s141 = sphi 0, %s140
    %s157 = sphi 0, %s141
  $region4: #{basic_block_forward.4} parent=0 // loop_header_branch
    %15 = sbr.rel (%p13) target = $region8
  $region5: #{basic_block_forward.4} parent=0 // loop_body
    %s17 = ssub.s32 %s12, 1
    %s18 = ssub.s32 %s12, 2
    %s19 = sadd.s32 %s12, 1
    %s20 = ssub.s32 %s12, %s19
    %p21 = scmp.eq.s32.totalorder %s20, 0
    %s23 = sadd.s32 %s22, 1
    %s24 = scalar_select %p21, %s22, %s23
    %p27 = pneg %p21
    %p28 = scmp.eq.s32.totalorder %s12, 1
    %p29 = por %p27, %p28
    %p30 = scmp.ne.s32.totalorder %s22, %s25
    %p31 = scmp.eq.s32.totalorder %s12, 0
    %p32 = por %p30, %p31
    %p33 = scmp.ne.s32.totalorder %s22, %s25
    %p34 = scmp.eq.s32.totalorder %s17, 1
    %p35 = por %p33, %p34
    %p36 = scmp.ne.s32.totalorder %s25, %s26
    %p37 = scmp.eq.s32.totalorder %s17, 0
    %p38 = por %p36, %p37
    %p39 = scmp.ne.s32.totalorder %s25, %s26
    %p40 = scmp.eq.s32.totalorder %s18, 1
    %p41 = por %p39, %p40
    %p43 = scmp.ne.s32.totalorder %s26, %s42
    %p44 = scmp.eq.s32.totalorder %s18, 0
    %p45 = por %p43, %p44
    %s47 = sadd.s32 %s46, 1
    %p50 = scmp.eq.s32.totalorder %s12, 1
    %p51 = scmp.ne.s32.totalorder %s46, %s48
    %p52 = scmp.eq.s32.totalorder %s12, 0
    %p53 = por %p51, %p52
    %p54 = scmp.ne.s32.totalorder %s46, %s48
    %p55 = scmp.eq.s32.totalorder %s17, 1
    %p56 = por %p54, %p55
    %p57 = scmp.ne.s32.totalorder %s48, %s49
    %p58 = scmp.eq.s32.totalorder %s17, 0
    %p59 = por %p57, %p58
    %p60 = scmp.ne.s32.totalorder %s48, %s49
    %p61 = scmp.eq.s32.totalorder %s18, 1
    %p62 = por %p60, %p61
    %p64 = scmp.ne.s32.totalorder %s49, %s63
    %p65 = scmp.eq.s32.totalorder %s18, 0
    %p66 = por %p64, %p65
    %s68 = sadd.s32 %s67, 1
    %p71 = scmp.eq.s32.totalorder %s12, 1
    %p72 = scmp.ne.s32.totalorder %s67, %s69
    %p73 = scmp.eq.s32.totalorder %s12, 0
    %p74 = por %p72, %p73
    %p75 = scmp.ne.s32.totalorder %s67, %s69
    %p76 = scmp.eq.s32.totalorder %s17, 1
    %p77 = por %p75, %p76
    %p78 = scmp.ne.s32.totalorder %s69, %s70
    %p79 = scmp.eq.s32.totalorder %s17, 0
    %p80 = por %p78, %p79
    %p81 = scmp.ne.s32.totalorder %s69, %s70
    %p82 = scmp.eq.s32.totalorder %s18, 1
    %p83 = por %p81, %p82
    %p85 = scmp.ne.s32.totalorder %s70, %s84
    %p86 = scmp.eq.s32.totalorder %s18, 0
    %p87 = por %p85, %p86
    %s89 = sadd.s32 %s88, 1
    %p92 = scmp.eq.s32.totalorder %s12, 1
    %p93 = scmp.ne.s32.totalorder %s88, %s90
    %p94 = scmp.eq.s32.totalorder %s12, 0
    %p95 = por %p93, %p94
    %p96 = scmp.ne.s32.totalorder %s88, %s90
    %p97 = scmp.eq.s32.totalorder %s17, 1
    %p98 = por %p96, %p97
    %p99 = scmp.ne.s32.totalorder %s90, %s91
    %p100 = scmp.eq.s32.totalorder %s17, 0
    %p101 = por %p99, %p100
    %p102 = scmp.ne.s32.totalorder %s90, %s91
    %p103 = scmp.eq.s32.totalorder %s18, 1
    %p104 = por %p102, %p103
    %p106 = scmp.ne.s32.totalorder %s91, %s105
    %p107 = scmp.eq.s32.totalorder %s18, 0
    %p108 = por %p106, %p107
    %s109 = ssub.s32 %s12, %s19
    %p110 = scmp.eq.s32.totalorder %s109, 0
    %s112 = sadd.s32 %s111, 1
    %s113 = scalar_select %p110, %s111, %s112
    %p116 = pneg %p110
    %p117 = scmp.eq.s32.totalorder %s12, 1
    %p118 = por %p116, %p117
    %p119 = scmp.ne.s32.totalorder %s111, %s114
    %p120 = scmp.eq.s32.totalorder %s12, 0
    %p121 = por %p119, %p120
    %p122 = scmp.ne.s32.totalorder %s111, %s114
    %p123 = scmp.eq.s32.totalorder %s17, 1
    %p124 = por %p122, %p123
    %p125 = scmp.ne.s32.totalorder %s114, %s115
    %p126 = scmp.eq.s32.totalorder %s17, 0
    %p127 = por %p125, %p126
    %p128 = scmp.ne.s32.totalorder %s114, %s115
    %p129 = scmp.eq.s32.totalorder %s18, 1
    %p130 = por %p128, %p129
    %p132 = scmp.ne.s32.totalorder %s115, %s131
    %p133 = scmp.eq.s32.totalorder %s18, 0
    %p134 = por %p132, %p133
    %s135 = ssub.s32 %s12, %s19
    %p136 = scmp.eq.s32.totalorder %s135, 0
    %s138 = sadd.s32 %s137, 1
    %s139 = scalar_select %p136, %s137, %s138
    %p142 = pneg %p136
    %p143 = scmp.eq.s32.totalorder %s12, 1
    %p144 = por %p142, %p143
    %p145 = scmp.ne.s32.totalorder %s137, %s140
    %p146 = scmp.eq.s32.totalorder %s12, 0
    %p147 = por %p145, %p146
    %p148 = scmp.ne.s32.totalorder %s137, %s140
    %p149 = scmp.eq.s32.totalorder %s17, 1
    %p150 = por %p148, %p149
    %p151 = scmp.ne.s32.totalorder %s140, %s141
    %p152 = scmp.eq.s32.totalorder %s17, 0
    %p153 = por %p151, %p152
    %p154 = scmp.ne.s32.totalorder %s140, %s141
    %p155 = scmp.eq.s32.totalorder %s18, 1
    %p156 = por %p154, %p155
    %p158 = scmp.ne.s32.totalorder %s141, %s157
    %p159 = scmp.eq.s32.totalorder %s18, 0
    %p160 = por %p158, %p159
    %p161 = scmp.le.s32.totalorder 1, %s12
    %p162 = scmp.lt.s32.totalorder %s12, 3
    %p163 = pnand %p161, %p162
    %p164 = pneg %p163
    // Predicated region
    $region9: #{basic_block_forward.4} parent=5 // pred_check
      _
    $region10: #{basic_block_forward.4} parent=5 // pred_check_branch
      %166 = sbr.rel (%p163) target = $region12
    $region11: #{basic_block_forward.4} parent=5 // pred_region
      %s167 = ssub.s32 %s12, 1
      // Predicated region
      $region13: #{basic_block_forward.4} parent=11 // pred_check
        %p168 = pneg %p59
      $region14: #{basic_block_forward.4} parent=11 // pred_check_branch
        %170 = sbr.rel (%p168) target = $region16
      $region15: #{basic_block_forward.4} parent=11 // pred_region
        _
      $region16: #{basic_block_forward.4} parent=11 // pred_fallthru
        _
      // Predicated region
      $region17: #{basic_block_forward.4} parent=11 // pred_check
        %p171 = pneg %p80
      $region18: #{basic_block_forward.4} parent=11 // pred_check_branch
        %173 = sbr.rel (%p171) target = $region20
      $region19: #{basic_block_forward.4} parent=11 // pred_region
        _
      $region20: #{basic_block_forward.4} parent=11 // pred_fallthru
        _
      // Predicated region
      $region21: #{basic_block_forward.4} parent=11 // pred_check
        %p174 = pneg %p101
      $region22: #{basic_block_forward.4} parent=11 // pred_check_branch
        %176 = sbr.rel (%p174) target = $region24
      $region23: #{basic_block_forward.4} parent=11 // pred_region
        _
      $region24: #{basic_block_forward.4} parent=11 // pred_fallthru
        _
    $region12: #{basic_block_forward.4} parent=5 // pred_fallthru
      _
    %p177 = scmp.lt.s32.totalorder %s12, 2
    // Predicated region
    $region25: #{basic_block_forward.4} parent=5 // pred_check
      %p178 = pneg %p177
    $region26: #{basic_block_forward.4} parent=5 // pred_check_branch
      %180 = sbr.rel (%p178) target = $region28
    $region27: #{basic_block_forward.4} parent=5 // pred_region
      // Predicated region
      $region29: #{basic_block_forward.4} parent=27 // pred_check
        %p181 = pneg %p32
      $region30: #{basic_block_forward.4} parent=27 // pred_check_branch
        %183 = sbr.rel (%p181) target = $region32
      $region31: #{basic_block_forward.4} parent=27 // pred_region
        %p184 = scmp.lt.s32.totalorder %s12, 1
        %s185 = scalar_select %p184, %s12, 1
        %s186 = smul.addr %s185, 2
        %s187 = smul.addr %s186, 8
        %s188 = scalar_lea.vmem %s0, %s187
      $region32: #{basic_block_forward.4} parent=27 // pred_fallthru
        _
    $region28: #{basic_block_forward.4} parent=5 // pred_fallthru
      _
    %p189 = scmp.le.s32.totalorder 1, %s12
    %p190 = scmp.lt.s32.totalorder %s12, 3
    %p191 = pnand %p189, %p190
    %p192 = pneg %p191
    // Predicated region
    $region33: #{basic_block_forward.4} parent=5 // pred_check
      _
    $region34: #{basic_block_forward.4} parent=5 // pred_check_branch
      %194 = sbr.rel (%p191) target = $region36
    $region35: #{basic_block_forward.4} parent=5 // pred_region
      %s195 = ssub.s32 %s12, 1
      %p196 = scmp.lt.s32.totalorder %s17, 1
      %s197 = scalar_select %p196, %s17, 1
      %s198 = smul.addr %s197, 2
      %s199 = smul.addr %s198, 8
      %s200 = scalar_lea.vmem %s0, %s199
      %p201 = pneg %p38
      %p202 = pneg %p35
      %p203 = pneg %p59
      %p204 = pneg %p56
      %p205 = pneg %p80
      %p206 = pneg %p77
      %p207 = pneg %p101
      %p208 = pneg %p98
      %p209 = pneg %p127
      %p210 = pneg %p124
      %p211 = scmp.lt.s32.totalorder %s17, 1
      %s212 = scalar_select %p211, %s17, 1
      %s213 = smul.addr %s212, 2
      %s214 = smul.addr %s213, 8
      %s215 = scalar_lea.vmem %s4, %s214
      %p216 = pneg %p153
      %p217 = pneg %p150
      %p218 = scmp.lt.s32.totalorder %s17, 1
      %s219 = scalar_select %p218, %s17, 1
      %s220 = smul.addr %s219, 2
      %s221 = scalar_lea.vmem %s5, %s220
      %p222 = scmp.lt.s32.totalorder %s17, 1
      %s223 = scalar_select %p222, %s17, 1
      %s224 = smul.addr %s223, 2
      %s225 = smul.addr %s224, 8
      %s226 = scalar_lea.vmem %s0, %s225
      %p227 = scmp.lt.s32.totalorder %s17, 1
      %s228 = scalar_select %p227, %s17, 1
      %s229 = smul.addr %s228, 2
      %s230 = smul.addr %s229, 8
      %s231 = scalar_lea.vmem %s4, %s230
      %p232 = scmp.lt.s32.totalorder %s17, 1
      %s233 = scalar_select %p232, %s17, 1
      %s234 = smul.addr %s233, 2
      %s235 = scalar_lea.vmem %s5, %s234
      %v236 = vld [vmem:[%s226] sm:$0xff]
      %v237 = vld [vmem:[%s226 + $0x8] sm:$0xff]
      %v238 = vld [vmem:[%s1] sm:$0x1]
      %v240 = vperm.slane %v238, 0
      %v242 = vmul.f32 %v236, %v240
      %v243 = vmul.f32 %v237, %v240
      %v244 = vld [vmem:[%s2] sm:$0x1]
      %v246 = vperm.slane %v244, 0
      %v248 = vadd.f32 %v242, %v246
      %v249 = vadd.f32 %v243, %v246
      %v250 = vmax.f32 %v248, 0.0
      %v251 = vmax.f32 %v249, 0.0
      %vm254 = vcmask 1040384
      %v255 = vrot.slane %v250, 7
      %v256 = vrot.slane %v251, 7
      %v257 = vsel %vm254, %v255, %v256
      %v261 = vsel %vm254, 0.0, %v255
      %v262 = vsel %vm254, %v256, 0.0
      %v263 = vpack.c.bf16 %v257, %v261
      %v264 = vld [vmem:[%s3] sm:$0xf]
      %v265 = vld [vmem:[%s3 + $0x4] sm:$0xf]
      %v266 = vld [vmem:[%s3 + $0x8] sm:$0xf]
      %v267 = vld [vmem:[%s3 + $0xc] sm:$0xf]
      %v268 = vld [vmem:[%s3 + $0x10] sm:$0xf]
      %v269 = vld [vmem:[%s3 + $0x14] sm:$0xf]
      %v270 = vld [vmem:[%s3 + $0x18] sm:$0xf]
      %v271 = vld [vmem:[%s3 + $0x1c] sm:$0xf]
      %v272 = vld [vmem:[%s3 + $0x20] sm:$0xf]
      %v273 = vld [vmem:[%s3 + $0x24] sm:$0xf]
      %v274 = vld [vmem:[%s3 + $0x28] sm:$0xf]
      %v275 = vld [vmem:[%s3 + $0x2c] sm:$0xf]
      %v276 = vld [vmem:[%s3 + $0x30] sm:$0xf]
      %v277 = vld [vmem:[%s3 + $0x34] sm:$0xf]
      %v278 = vld [vmem:[%s3 + $0x38] sm:$0xf]
      %v279 = vld [vmem:[%s3 + $0x3c] sm:$0xf]
      %v280 = vpack.c.bf16 %v262, %v262
      %s281 = scalar_lea.vmem %s3, 64
      %v282 = vld [vmem:[%s281] sm:$0xf]
      %v283 = vld [vmem:[%s281 + $0x4] sm:$0xf]
      %v284 = vld [vmem:[%s281 + $0x8] sm:$0xf]
      %v285 = vld [vmem:[%s281 + $0xc] sm:$0xf]
      %v286 = vld [vmem:[%s281 + $0x10] sm:$0xf]
      %v287 = vld [vmem:[%s281 + $0x14] sm:$0xf]
      %v288 = vld [vmem:[%s281 + $0x18] sm:$0xf]
      %v289 = vld [vmem:[%s281 + $0x1c] sm:$0xf]
      %v290 = vld [vmem:[%s281 + $0x20] sm:$0xf]
      %v291 = vld [vmem:[%s281 + $0x24] sm:$0xf]
      %v292 = vld [vmem:[%s281 + $0x28] sm:$0xf]
      %v293 = vld [vmem:[%s281 + $0x2c] sm:$0xf]
      %v294 = vld [vmem:[%s281 + $0x30] sm:$0xf]
      %v295 = vld [vmem:[%s281 + $0x34] sm:$0xf]
      %v296 = vld [vmem:[%s281 + $0x38] sm:$0xf]
      %v297 = vld [vmem:[%s281 + $0x3c] sm:$0xf]
      %vm298 = vsmask.f32 7424
      %v300 = vshrl.u32 %v263, 16
      %v302 = vshll.u32 %v263, 16
      %v304 = vrot.slane %v302, 1
      %v305 = vor.u32 %v300, %v304
      %v307 = vshll.u32 %v280, 16
      %v309 = vrot.slane %v307, 1
      %v310 = vsel %vm298, %v305, %v309
      %v328 = vunpack.c.l.b16 %v282
      %v329 = vunpack.c.l.b16 %v283
      %v330 = vunpack.c.l.b16 %v284
      %v331 = vunpack.c.l.b16 %v285
      %v332 = vunpack.c.l.b16 %v286
      %v333 = vunpack.c.l.b16 %v287
      %v334 = vunpack.c.l.b16 %v288
      %v335 = vunpack.c.l.b16 %v289
      %v336 = vunpack.c.l.b16 %v290
      %v337 = vunpack.c.l.b16 %v291
      %v338 = vunpack.c.l.b16 %v292
      %v339 = vunpack.c.l.b16 %v293
      %v340 = vunpack.c.l.b16 %v294
      %v341 = vunpack.c.l.b16 %v295
      %v342 = vunpack.c.l.b16 %v296
      %v343 = vunpack.c.l.b16 %v297
      %v344 = vpack.c.b16 %v329, %v328
      %v345 = vpack.c.b16 %v331, %v330
      %v346 = vpack.c.b16 %v333, %v332
      %v347 = vpack.c.b16 %v335, %v334
      %v348 = vpack.c.b16 %v337, %v336
      %v349 = vpack.c.b16 %v339, %v338
      %v350 = vpack.c.b16 %v341, %v340
      %v351 = vpack.c.b16 %v343, %v342
      %360 = vmatpush.bf16.msra.mxu0 %v351
      %361 = vmatpush.bf16.msra.mxu0 %v350
      %362 = vmatpush.bf16.msra.mxu0 %v349
      %363 = vmatpush.bf16.msra.mxu0 %v348
      %364 = vmatpush.bf16.msra.mxu0 %v347
      %365 = vmatpush.bf16.msra.mxu0 %v346
      %366 = vmatpush.bf16.msra.mxu0 %v345
      %367 = vmatpush.bf16.msra.mxu0 %v344
      %368 = vmatmul.bf16.gmra.mxu0 %v310
      %v369 = vpop.f32.mrf.mxu0
      %v370 = vadd.f32 0.0, %v369
      %v371 = vpop.f32.mrf.mxu0
      %v372 = vadd.f32 0.0, %v371
      %373 = vdwg.mxu0
      %v390 = vunpack.c.l.b16 %v264
      %v391 = vunpack.c.l.b16 %v265
      %v392 = vunpack.c.l.b16 %v266
      %v393 = vunpack.c.l.b16 %v267
      %v394 = vunpack.c.l.b16 %v268
      %v395 = vunpack.c.l.b16 %v269
      %v396 = vunpack.c.l.b16 %v270
      %v397 = vunpack.c.l.b16 %v271
      %v398 = vunpack.c.l.b16 %v272
      %v399 = vunpack.c.l.b16 %v273
      %v400 = vunpack.c.l.b16 %v274
      %v401 = vunpack.c.l.b16 %v275
      %v402 = vunpack.c.l.b16 %v276
      %v403 = vunpack.c.l.b16 %v277
      %v404 = vunpack.c.l.b16 %v278
      %v405 = vunpack.c.l.b16 %v279
      %v406 = vpack.c.b16 %v391, %v390
      %v407 = vpack.c.b16 %v393, %v392
      %v408 = vpack.c.b16 %v395, %v394
      %v409 = vpack.c.b16 %v397, %v396
      %v410 = vpack.c.b16 %v399, %v398
      %v411 = vpack.c.b16 %v401, %v400
      %v412 = vpack.c.b16 %v403, %v402
      %v413 = vpack.c.b16 %v405, %v404
      %422 = vmatpush.bf16.msra.mxu0 %v413
      %423 = vmatpush.bf16.msra.mxu0 %v412
      %424 = vmatpush.bf16.msra.mxu0 %v411
      %425 = vmatpush.bf16.msra.mxu0 %v410
      %426 = vmatpush.bf16.msra.mxu0 %v409
      %427 = vmatpush.bf16.msra.mxu0 %v408
      %428 = vmatpush.bf16.msra.mxu0 %v407
      %429 = vmatpush.bf16.msra.mxu0 %v406
      %430 = vmatmul.bf16.gmra.mxu0 %v263
      %v431 = vpop.f32.mrf.mxu0
      %v432 = vadd.f32 %v370, %v431
      %v433 = vpop.f32.mrf.mxu0
      %v434 = vadd.f32 %v372, %v433
      %435 = vdwg.mxu0
      %s436 = scalar_lea.vmem %s3, 128
      %v437 = vld [vmem:[%s436] sm:$0xf]
      %v438 = vld [vmem:[%s436 + $0x4] sm:$0xf]
      %v439 = vld [vmem:[%s436 + $0x8] sm:$0xf]
      %v440 = vld [vmem:[%s436 + $0xc] sm:$0xf]
      %v441 = vld [vmem:[%s436 + $0x10] sm:$0xf]
      %v442 = vld [vmem:[%s436 + $0x14] sm:$0xf]
      %v443 = vld [vmem:[%s436 + $0x18] sm:$0xf]
      %v444 = vld [vmem:[%s436 + $0x1c] sm:$0xf]
      %v445 = vld [vmem:[%s436 + $0x20] sm:$0xf]
      %v446 = vld [vmem:[%s436 + $0x24] sm:$0xf]
      %v447 = vld [vmem:[%s436 + $0x28] sm:$0xf]
      %v448 = vld [vmem:[%s436 + $0x2c] sm:$0xf]
      %v449 = vld [vmem:[%s436 + $0x30] sm:$0xf]
      %v450 = vld [vmem:[%s436 + $0x34] sm:$0xf]
      %v451 = vld [vmem:[%s436 + $0x38] sm:$0xf]
      %v452 = vld [vmem:[%s436 + $0x3c] sm:$0xf]
      %vm455 = vcmask 1046528
      %v456 = vrot.slane %v263, 1
      %v457 = vrot.slane %v280, 1
      %v458 = vsel %vm455, %v456, %v457
      %v476 = vunpack.c.l.b16 %v437
      %v477 = vunpack.c.l.b16 %v438
      %v478 = vunpack.c.l.b16 %v439
      %v479 = vunpack.c.l.b16 %v440
      %v480 = vunpack.c.l.b16 %v441
      %v481 = vunpack.c.l.b16 %v442
      %v482 = vunpack.c.l.b16 %v443
      %v483 = vunpack.c.l.b16 %v444
      %v484 = vunpack.c.l.b16 %v445
      %v485 = vunpack.c.l.b16 %v446
      %v486 = vunpack.c.l.b16 %v447
      %v487 = vunpack.c.l.b16 %v448
      %v488 = vunpack.c.l.b16 %v449
      %v489 = vunpack.c.l.b16 %v450
      %v490 = vunpack.c.l.b16 %v451
      %v491 = vunpack.c.l.b16 %v452
      %v492 = vpack.c.b16 %v477, %v476
      %v493 = vpack.c.b16 %v479, %v478
      %v494 = vpack.c.b16 %v481, %v480
      %v495 = vpack.c.b16 %v483, %v482
      %v496 = vpack.c.b16 %v485, %v484
      %v497 = vpack.c.b16 %v487, %v486
      %v498 = vpack.c.b16 %v489, %v488
      %v499 = vpack.c.b16 %v491, %v490
      %508 = vmatpush.bf16.msra.mxu0 %v499
      %509 = vmatpush.bf16.msra.mxu0 %v498
      %510 = vmatpush.bf16.msra.mxu0 %v497
      %511 = vmatpush.bf16.msra.mxu0 %v496
      %512 = vmatpush.bf16.msra.mxu0 %v495
      %513 = vmatpush.bf16.msra.mxu0 %v494
      %514 = vmatpush.bf16.msra.mxu0 %v493
      %515 = vmatpush.bf16.msra.mxu0 %v492
      %516 = vmatmul.bf16.gmra.mxu0 %v458
      %v517 = vpop.f32.mrf.mxu0
      %v518 = vadd.f32 0.0, %v517
      %v519 = vpop.f32.mrf.mxu0
      %v520 = vadd.f32 0.0, %v519
      %521 = vdwg.mxu0
      %v522 = vadd.f32 %v432, %v518
      %v523 = vadd.f32 %v434, %v520
      %524 = vst [vmem:[%s231] sm:$0xff] %v522
      %525 = vst [vmem:[%s231 + $0x8] sm:$0xff] %v523
      %v526 = vadd.f32 %v522, %v523
      %v527 = vrot.slane %v526, 4
      %v528 = vadd.f32 %v526, %v527
      %v529 = vrot.slane %v528, 2
      %v530 = vadd.f32 %v528, %v529
      %v531 = vrot.slane %v530, 1
      %v532 = vadd.f32 %v530, %v531
      %v533 = vmul.f32 %v522, %v522
      %v534 = vmul.f32 %v523, %v523
      %v535 = vadd.f32 %v533, %v534
      %v536 = vrot.slane %v535, 4
      %v537 = vadd.f32 %v535, %v536
      %v538 = vrot.slane %v537, 2
      %v539 = vadd.f32 %v537, %v538
      %v540 = vrot.slane %v539, 1
      %v541 = vadd.f32 %v539, %v540
      %v542 = vsel %vm254, %v532, %v541
      %543 = vst [vmem:[%s235] sm:$0x3] %v542
      %p544 = scmp.lt.s32.totalorder %s17, 1
      %s545 = scalar_select %p544, %s17, 1
      %s546 = smul.addr %s545, 2
      %s547 = smul.addr %s546, 8
      %s548 = scalar_lea.vmem %s4, %s547
      %p549 = scmp.lt.s32.totalorder %s17, 1
      %s550 = scalar_select %p549, %s17, 1
      %s551 = smul.addr %s550, 2
      %s552 = scalar_lea.vmem %s5, %s551
      // Predicated region
      $region37: #{basic_block_forward.4} parent=35 // pred_check
        %p553 = pneg %p124
      $region38: #{basic_block_forward.4} parent=35 // pred_check_branch
        %555 = sbr.rel (%p553) target = $region40
      $region39: #{basic_block_forward.4} parent=35 // pred_region
        _
      $region40: #{basic_block_forward.4} parent=35 // pred_fallthru
        _
      // Predicated region
      $region41: #{basic_block_forward.4} parent=35 // pred_check
        %p556 = pneg %p150
      $region42: #{basic_block_forward.4} parent=35 // pred_check_branch
        %558 = sbr.rel (%p556) target = $region44
      $region43: #{basic_block_forward.4} parent=35 // pred_region
        _
      $region44: #{basic_block_forward.4} parent=35 // pred_fallthru
        _
    $region36: #{basic_block_forward.4} parent=5 // pred_fallthru
      _
    %p559 = scmp.le.s32.totalorder 2, %s12
    // Predicated region
    $region45: #{basic_block_forward.4} parent=5 // pred_check
      %p560 = pneg %p559
    $region46: #{basic_block_forward.4} parent=5 // pred_check_branch
      %562 = sbr.rel (%p560) target = $region48
    $region47: #{basic_block_forward.4} parent=5 // pred_region
      %s563 = ssub.s32 %s12, 2
      // Predicated region
      $region49: #{basic_block_forward.4} parent=47 // pred_check
        %p564 = pneg %p130
      $region50: #{basic_block_forward.4} parent=47 // pred_check_branch
        %566 = sbr.rel (%p564) target = $region52
      $region51: #{basic_block_forward.4} parent=47 // pred_region
        %p567 = scmp.lt.s32.totalorder %s18, 1
        %s568 = scalar_select %p567, %s18, 1
        %s569 = smul.addr %s568, 2
        %s570 = smul.addr %s569, 8
        %s571 = scalar_lea.vmem %s4, %s570
      $region52: #{basic_block_forward.4} parent=47 // pred_fallthru
        _
      // Predicated region
      $region53: #{basic_block_forward.4} parent=47 // pred_check
        %p572 = pneg %p156
      $region54: #{basic_block_forward.4} parent=47 // pred_check_branch
        %574 = sbr.rel (%p572) target = $region56
      $region55: #{basic_block_forward.4} parent=47 // pred_region
        %p575 = scmp.lt.s32.totalorder %s18, 1
        %s576 = scalar_select %p575, %s18, 1
        %s577 = smul.addr %s576, 2
        %s578 = scalar_lea.vmem %s5, %s577
      $region56: #{basic_block_forward.4} parent=47 // pred_fallthru
        _
    $region48: #{basic_block_forward.4} parent=5 // pred_fallthru
      _
  $region6: #{basic_block_forward.4} parent=0 // loop_footer
    %s16 = sadd.s32 1, %s12
  $region7: #{basic_block_forward.4} parent=0 // loop_footer_branch
    %11 = sbr.rel target = $region3
  $region8: #{basic_block_forward.4} parent=0 // loop_exit
    _

// kernel: basic_block_forward.5
$region0: #{basic_block_forward.5}
  #allocation0 [shape = 'u32[]', space=smem, size = 0x4, offset = 0x4, fixed_abs, tag = 'smem constant byte address 0x4 - core index']
  #allocation1 [shape = 'u32[72,128]{1,0:T(1,128)}', space=vmem, size = 0x9000, scoped, tag = 'internal scratch']
  %s0 = inlined_call_operand.vmem [shape: f32[2,16,128], index: 0, kind: input, shape index: {}]
  %s1 = inlined_call_operand.vmem [shape: f32[2,16,128], index: 1, kind: input, shape index: {}]
  %s2 = inlined_call_operand.vmem [shape: f32[1,128], index: 2, kind: input, shape index: {}]
  %s3 = inlined_call_operand.vmem [shape: f32[1,128], index: 3, kind: input, shape index: {}]
  %s4 = inlined_call_operand.vmem [shape: f32[1,128], index: 4, kind: input, shape index: {}]
  %s5 = inlined_call_operand.vmem [shape: f32[1,128], index: 5, kind: input, shape index: {}]
  %s6 = inlined_call_operand.vmem [shape: f32[2,16,128], index: 6, kind: output, shape index: {}]
  %s7 = sld [smem:[#allocation0]]
  $region57: #{basic_block_forward.5} parent=0
    _
  %s9 = ssub.s32 1, %s7
  %s10 = scalar_select 0, %s9, %s7
  loop: start=0, step=1, limit=4
  $region2: #{basic_block_forward.5} parent=0 // loop_pre_header
    _
  $region3: #{basic_block_forward.5} parent=0 // loop_header
    %s12 = sphi 0, %s16
    %p13 = scmp.ge.s32.totalorder %s12, 4
    %s22 = sphi 0, %s24
    %s25 = sphi 0, %s22
    %s26 = sphi 0, %s25
    %s42 = sphi 0, %s26
    %s48 = sphi 0, %s50
    %s51 = sphi 0, %s48
    %s52 = sphi 0, %s51
    %s68 = sphi 0, %s52
    %s72 = sphi 0, %s72
    %s74 = sphi 0, %s72
    %s75 = sphi 0, %s74
    %s89 = sphi 0, %s75
    %s93 = sphi 0, %s93
    %s95 = sphi 0, %s93
    %s96 = sphi 0, %s95
    %s110 = sphi 0, %s96
    %s114 = sphi 0, %s114
    %s116 = sphi 0, %s114
    %s117 = sphi 0, %s116
    %s131 = sphi 0, %s117
    %s135 = sphi 0, %s135
    %s137 = sphi 0, %s135
    %s138 = sphi 0, %s137
    %s152 = sphi 0, %s138
    %s158 = sphi 0, %s160
    %s161 = sphi 0, %s158
    %s162 = sphi 0, %s161
    %s178 = sphi 0, %s162
  $region4: #{basic_block_forward.5} parent=0 // loop_header_branch
    %15 = sbr.rel (%p13) target = $region8
  $region5: #{basic_block_forward.5} parent=0 // loop_body
    %s17 = ssub.s32 %s12, 1
    %s18 = ssub.s32 %s12, 2
    %s19 = sadd.s32 %s12, 1
    %s20 = ssub.s32 %s12, %s19
    %p21 = scmp.eq.s32.totalorder %s20, 0
    %s23 = sadd.s32 %s22, 1
    %s24 = scalar_select %p21, %s22, %s23
    %p27 = pneg %p21
    %p28 = scmp.eq.s32.totalorder %s12, 1
    %p29 = por %p27, %p28
    %p30 = scmp.ne.s32.totalorder %s22, %s25
    %p31 = scmp.eq.s32.totalorder %s12, 0
    %p32 = por %p30, %p31
    %p33 = scmp.ne.s32.totalorder %s22, %s25
    %p34 = scmp.eq.s32.totalorder %s17, 1
    %p35 = por %p33, %p34
    %p36 = scmp.ne.s32.totalorder %s25, %s26
    %p37 = scmp.eq.s32.totalorder %s17, 0
    %p38 = por %p36, %p37
    %p39 = scmp.ne.s32.totalorder %s25, %s26
    %p40 = scmp.eq.s32.totalorder %s18, 1
    %p41 = por %p39, %p40
    %p43 = scmp.ne.s32.totalorder %s26, %s42
    %p44 = scmp.eq.s32.totalorder %s18, 0
    %p45 = por %p43, %p44
    %s46 = ssub.s32 %s12, %s19
    %p47 = scmp.eq.s32.totalorder %s46, 0
    %s49 = sadd.s32 %s48, 1
    %s50 = scalar_select %p47, %s48, %s49
    %p53 = pneg %p47
    %p54 = scmp.eq.s32.totalorder %s12, 1
    %p55 = por %p53, %p54
    %p56 = scmp.ne.s32.totalorder %s48, %s51
    %p57 = scmp.eq.s32.totalorder %s12, 0
    %p58 = por %p56, %p57
    %p59 = scmp.ne.s32.totalorder %s48, %s51
    %p60 = scmp.eq.s32.totalorder %s17, 1
    %p61 = por %p59, %p60
    %p62 = scmp.ne.s32.totalorder %s51, %s52
    %p63 = scmp.eq.s32.totalorder %s17, 0
    %p64 = por %p62, %p63
    %p65 = scmp.ne.s32.totalorder %s51, %s52
    %p66 = scmp.eq.s32.totalorder %s18, 1
    %p67 = por %p65, %p66
    %p69 = scmp.ne.s32.totalorder %s52, %s68
    %p70 = scmp.eq.s32.totalorder %s18, 0
    %p71 = por %p69, %p70
    %s73 = sadd.s32 %s72, 1
    %p76 = scmp.eq.s32.totalorder %s12, 1
    %p77 = scmp.ne.s32.totalorder %s72, %s74
    %p78 = scmp.eq.s32.totalorder %s12, 0
    %p79 = por %p77, %p78
    %p80 = scmp.ne.s32.totalorder %s72, %s74
    %p81 = scmp.eq.s32.totalorder %s17, 1
    %p82 = por %p80, %p81
    %p83 = scmp.ne.s32.totalorder %s74, %s75
    %p84 = scmp.eq.s32.totalorder %s17, 0
    %p85 = por %p83, %p84
    %p86 = scmp.ne.s32.totalorder %s74, %s75
    %p87 = scmp.eq.s32.totalorder %s18, 1
    %p88 = por %p86, %p87
    %p90 = scmp.ne.s32.totalorder %s75, %s89
    %p91 = scmp.eq.s32.totalorder %s18, 0
    %p92 = por %p90, %p91
    %s94 = sadd.s32 %s93, 1
    %p97 = scmp.eq.s32.totalorder %s12, 1
    %p98 = scmp.ne.s32.totalorder %s93, %s95
    %p99 = scmp.eq.s32.totalorder %s12, 0
    %p100 = por %p98, %p99
    %p101 = scmp.ne.s32.totalorder %s93, %s95
    %p102 = scmp.eq.s32.totalorder %s17, 1
    %p103 = por %p101, %p102
    %p104 = scmp.ne.s32.totalorder %s95, %s96
    %p105 = scmp.eq.s32.totalorder %s17, 0
    %p106 = por %p104, %p105
    %p107 = scmp.ne.s32.totalorder %s95, %s96
    %p108 = scmp.eq.s32.totalorder %s18, 1
    %p109 = por %p107, %p108
    %p111 = scmp.ne.s32.totalorder %s96, %s110
    %p112 = scmp.eq.s32.totalorder %s18, 0
    %p113 = por %p111, %p112
    %s115 = sadd.s32 %s114, 1
    %p118 = scmp.eq.s32.totalorder %s12, 1
    %p119 = scmp.ne.s32.totalorder %s114, %s116
    %p120 = scmp.eq.s32.totalorder %s12, 0
    %p121 = por %p119, %p120
    %p122 = scmp.ne.s32.totalorder %s114, %s116
    %p123 = scmp.eq.s32.totalorder %s17, 1
    %p124 = por %p122, %p123
    %p125 = scmp.ne.s32.totalorder %s116, %s117
    %p126 = scmp.eq.s32.totalorder %s17, 0
    %p127 = por %p125, %p126
    %p128 = scmp.ne.s32.totalorder %s116, %s117
    %p129 = scmp.eq.s32.totalorder %s18, 1
    %p130 = por %p128, %p129
    %p132 = scmp.ne.s32.totalorder %s117, %s131
    %p133 = scmp.eq.s32.totalorder %s18, 0
    %p134 = por %p132, %p133
    %s136 = sadd.s32 %s135, 1
    %p139 = scmp.eq.s32.totalorder %s12, 1
    %p140 = scmp.ne.s32.totalorder %s135, %s137
    %p141 = scmp.eq.s32.totalorder %s12, 0
    %p142 = por %p140, %p141
    %p143 = scmp.ne.s32.totalorder %s135, %s137
    %p144 = scmp.eq.s32.totalorder %s17, 1
    %p145 = por %p143, %p144
    %p146 = scmp.ne.s32.totalorder %s137, %s138
    %p147 = scmp.eq.s32.totalorder %s17, 0
    %p148 = por %p146, %p147
    %p149 = scmp.ne.s32.totalorder %s137, %s138
    %p150 = scmp.eq.s32.totalorder %s18, 1
    %p151 = por %p149, %p150
    %p153 = scmp.ne.s32.totalorder %s138, %s152
    %p154 = scmp.eq.s32.totalorder %s18, 0
    %p155 = por %p153, %p154
    %s156 = ssub.s32 %s12, %s19
    %p157 = scmp.eq.s32.totalorder %s156, 0
    %s159 = sadd.s32 %s158, 1
    %s160 = scalar_select %p157, %s158, %s159
    %p163 = pneg %p157
    %p164 = scmp.eq.s32.totalorder %s12, 1
    %p165 = por %p163, %p164
    %p166 = scmp.ne.s32.totalorder %s158, %s161
    %p167 = scmp.eq.s32.totalorder %s12, 0
    %p168 = por %p166, %p167
    %p169 = scmp.ne.s32.totalorder %s158, %s161
    %p170 = scmp.eq.s32.totalorder %s17, 1
    %p171 = por %p169, %p170
    %p172 = scmp.ne.s32.totalorder %s161, %s162
    %p173 = scmp.eq.s32.totalorder %s17, 0
    %p174 = por %p172, %p173
    %p175 = scmp.ne.s32.totalorder %s161, %s162
    %p176 = scmp.eq.s32.totalorder %s18, 1
    %p177 = por %p175, %p176
    %p179 = scmp.ne.s32.totalorder %s162, %s178
    %p180 = scmp.eq.s32.totalorder %s18, 0
    %p181 = por %p179, %p180
    %p182 = scmp.le.s32.totalorder 1, %s12
    %p183 = scmp.lt.s32.totalorder %s12, 3
    %p184 = pnand %p182, %p183
    %p185 = pneg %p184
    // Predicated region
    $region9: #{basic_block_forward.5} parent=5 // pred_check
      _
    $region10: #{basic_block_forward.5} parent=5 // pred_check_branch
      %187 = sbr.rel (%p184) target = $region12
    $region11: #{basic_block_forward.5} parent=5 // pred_region
      %s188 = ssub.s32 %s12, 1
      // Predicated region
      $region13: #{basic_block_forward.5} parent=11 // pred_check
        %p189 = pneg %p85
      $region14: #{basic_block_forward.5} parent=11 // pred_check_branch
        %191 = sbr.rel (%p189) target = $region16
      $region15: #{basic_block_forward.5} parent=11 // pred_region
        _
      $region16: #{basic_block_forward.5} parent=11 // pred_fallthru
        _
      // Predicated region
      $region17: #{basic_block_forward.5} parent=11 // pred_check
        %p192 = pneg %p106
      $region18: #{basic_block_forward.5} parent=11 // pred_check_branch
        %194 = sbr.rel (%p192) target = $region20
      $region19: #{basic_block_forward.5} parent=11 // pred_region
        _
      $region20: #{basic_block_forward.5} parent=11 // pred_fallthru
        _
      // Predicated region
      $region21: #{basic_block_forward.5} parent=11 // pred_check
        %p195 = pneg %p127
      $region22: #{basic_block_forward.5} parent=11 // pred_check_branch
        %197 = sbr.rel (%p195) target = $region24
      $region23: #{basic_block_forward.5} parent=11 // pred_region
        _
      $region24: #{basic_block_forward.5} parent=11 // pred_fallthru
        _
      // Predicated region
      $region25: #{basic_block_forward.5} parent=11 // pred_check
        %p198 = pneg %p148
      $region26: #{basic_block_forward.5} parent=11 // pred_check_branch
        %200 = sbr.rel (%p198) target = $region28
      $region27: #{basic_block_forward.5} parent=11 // pred_region
        _
      $region28: #{basic_block_forward.5} parent=11 // pred_fallthru
        _
    $region12: #{basic_block_forward.5} parent=5 // pred_fallthru
      _
    %p201 = scmp.lt.s32.totalorder %s12, 2
    // Predicated region
    $region29: #{basic_block_forward.5} parent=5 // pred_check
      %p202 = pneg %p201
    $region30: #{basic_block_forward.5} parent=5 // pred_check_branch
      %204 = sbr.rel (%p202) target = $region32
    $region31: #{basic_block_forward.5} parent=5 // pred_region
      // Predicated region
      $region33: #{basic_block_forward.5} parent=31 // pred_check
        %p205 = pneg %p32
      $region34: #{basic_block_forward.5} parent=31 // pred_check_branch
        %207 = sbr.rel (%p205) target = $region36
      $region35: #{basic_block_forward.5} parent=31 // pred_region
        %p208 = scmp.lt.s32.totalorder %s12, 1
        %s209 = scalar_select %p208, %s12, 1
        %s210 = smul.addr %s209, 2
        %s211 = smul.addr %s210, 8
        %s212 = scalar_lea.vmem %s0, %s211
      $region36: #{basic_block_forward.5} parent=31 // pred_fallthru
        _
      // Predicated region
      $region37: #{basic_block_forward.5} parent=31 // pred_check
        %p213 = pneg %p58
      $region38: #{basic_block_forward.5} parent=31 // pred_check_branch
        %215 = sbr.rel (%p213) target = $region40
      $region39: #{basic_block_forward.5} parent=31 // pred_region
        %p216 = scmp.lt.s32.totalorder %s12, 1
        %s217 = scalar_select %p216, %s12, 1
        %s218 = smul.addr %s217, 2
        %s219 = smul.addr %s218, 8
        %s220 = scalar_lea.vmem %s1, %s219
      $region40: #{basic_block_forward.5} parent=31 // pred_fallthru
        _
    $region32: #{basic_block_forward.5} parent=5 // pred_fallthru
      _
    %p221 = scmp.le.s32.totalorder 1, %s12
    %p222 = scmp.lt.s32.totalorder %s12, 3
    %p223 = pnand %p221, %p222
    %p224 = pneg %p223
    // Predicated region
    $region41: #{basic_block_forward.5} parent=5 // pred_check
      _
    $region42: #{basic_block_forward.5} parent=5 // pred_check_branch
      %226 = sbr.rel (%p223) target = $region44
    $region43: #{basic_block_forward.5} parent=5 // pred_region
      %s227 = ssub.s32 %s12, 1
      %p228 = scmp.lt.s32.totalorder %s17, 1
      %s229 = scalar_select %p228, %s17, 1
      %s230 = smul.addr %s229, 2
      %s231 = smul.addr %s230, 8
      %s232 = scalar_lea.vmem %s0, %s231
      %p233 = pneg %p38
      %p234 = pneg %p35
      %p235 = scmp.lt.s32.totalorder %s17, 1
      %s236 = scalar_select %p235, %s17, 1
      %s237 = smul.addr %s236, 2
      %s238 = smul.addr %s237, 8
      %s239 = scalar_lea.vmem %s1, %s238
      %p240 = pneg %p64
      %p241 = pneg %p61
      %p242 = pneg %p85
      %p243 = pneg %p82
      %p244 = pneg %p106
      %p245 = pneg %p103
      %p246 = pneg %p127
      %p247 = pneg %p124
      %p248 = pneg %p148
      %p249 = pneg %p145
      %p250 = pneg %p174
      %p251 = pneg %p171
      %p252 = scmp.lt.s32.totalorder %s17, 1
      %s253 = scalar_select %p252, %s17, 1
      %s254 = smul.addr %s253, 2
      %s255 = smul.addr %s254, 8
      %s256 = scalar_lea.vmem %s6, %s255
      %p257 = scmp.lt.s32.totalorder %s17, 1
      %s258 = scalar_select %p257, %s17, 1
      %s259 = smul.addr %s258, 2
      %s260 = smul.addr %s259, 8
      %s261 = scalar_lea.vmem %s0, %s260
      %p262 = scmp.lt.s32.totalorder %s17, 1
      %s263 = scalar_select %p262, %s17, 1
      %s264 = smul.addr %s263, 2
      %s265 = smul.addr %s264, 8
      %s266 = scalar_lea.vmem %s1, %s265
      %p267 = scmp.lt.s32.totalorder %s17, 1
      %s268 = scalar_select %p267, %s17, 1
      %s269 = smul.addr %s268, 2
      %s270 = smul.addr %s269, 8
      %s271 = scalar_lea.vmem %s6, %s270
      %v272 = vld [vmem:[%s261] sm:$0xff]
      %v273 = vld [vmem:[%s261 + $0x8] sm:$0xff]
      %v274 = vld [vmem:[%s2] sm:$0x1]
      %v276 = vperm.slane %v274, 0
      %v278 = vmul.f32 %v272, %v276
      %v279 = vmul.f32 %v273, %v276
      %v280 = vld [vmem:[%s3] sm:$0x1]
      %v282 = vperm.slane %v280, 0
      %v284 = vadd.f32 %v278, %v282
      %v285 = vadd.f32 %v279, %v282
      %v286 = vld [vmem:[%s266] sm:$0xff]
      %v287 = vld [vmem:[%s266 + $0x8] sm:$0xff]
      %v288 = vld [vmem:[%s4] sm:$0x1]
      %v290 = vperm.slane %v288, 0
      %v292 = vmul.f32 %v286, %v290
      %v293 = vmul.f32 %v287, %v290
      %v294 = vld [vmem:[%s5] sm:$0x1]
      %v296 = vperm.slane %v294, 0
      %v298 = vadd.f32 %v292, %v296
      %v299 = vadd.f32 %v293, %v296
      %v300 = vadd.f32 %v284, %v298
      %v301 = vadd.f32 %v285, %v299
      %v302 = vmax.f32 %v300, 0.0
      %v303 = vmax.f32 %v301, 0.0
      %304 = vst [vmem:[%s271] sm:$0xff] %v302
      %305 = vst [vmem:[%s271 + $0x8] sm:$0xff] %v303
      %p306 = scmp.lt.s32.totalorder %s17, 1
      %s307 = scalar_select %p306, %s17, 1
      %s308 = smul.addr %s307, 2
      %s309 = smul.addr %s308, 8
      %s310 = scalar_lea.vmem %s6, %s309
      // Predicated region
      $region45: #{basic_block_forward.5} parent=43 // pred_check
        %p311 = pneg %p171
      $region46: #{basic_block_forward.5} parent=43 // pred_check_branch
        %313 = sbr.rel (%p311) target = $region48
      $region47: #{basic_block_forward.5} parent=43 // pred_region
        _
      $region48: #{basic_block_forward.5} parent=43 // pred_fallthru
        _
    $region44: #{basic_block_forward.5} parent=5 // pred_fallthru
      _
    %p314 = scmp.le.s32.totalorder 2, %s12
    // Predicated region
    $region49: #{basic_block_forward.5} parent=5 // pred_check
      %p315 = pneg %p314
    $region50: #{basic_block_forward.5} parent=5 // pred_check_branch
      %317 = sbr.rel (%p315) target = $region52
    $region51: #{basic_block_forward.5} parent=5 // pred_region
      %s318 = ssub.s32 %s12, 2
      // Predicated region
      $region53: #{basic_block_forward.5} parent=51 // pred_check
        %p319 = pneg %p177
      $region54: #{basic_block_forward.5} parent=51 // pred_check_branch
        %321 = sbr.rel (%p319) target = $region56
      $region55: #{basic_block_forward.5} parent=51 // pred_region
        %p322 = scmp.lt.s32.totalorder %s18, 1
        %s323 = scalar_select %p322, %s18, 1
        %s324 = smul.addr %s323, 2
        %s325 = smul.addr %s324, 8
        %s326 = scalar_lea.vmem %s6, %s325
      $region56: #{basic_block_forward.5} parent=51 // pred_fallthru
        _
    $region52: #{basic_block_forward.5} parent=5 // pred_fallthru
      _
  $region6: #{basic_block_forward.5} parent=0 // loop_footer
    %s16 = sadd.s32 1, %s12
  $region7: #{basic_block_forward.5} parent=0 // loop_footer_branch
    %11 = sbr.rel target = $region3
  $region8: #{basic_block_forward.5} parent=0 // loop_exit
    _

</llo_original>
